<compile_context>
chip_gen: v5e
topology: v5e:2x2
jax: 0.10.0
libtpu: 0.0.40
codegen_flags: <defaults>
</compile_context>

<pallas_src>
import functools

import jax
import jax.numpy as jnp
from jax.experimental import pallas as pl
from jax.experimental.pallas import tpu as pltpu

# ----------------------------- config ---------------------------------------
DIM = 32
N_HEADS = 4
HEAD_DIM = DIM // N_HEADS
NORM_EPS = 1e-6
GATE_LOGIT_NORMALIZER = 16
CHUNK_SIZE = 256  # single-chunk parallel form is exact for T <= CHUNK_SIZE


# ----------------------------- helpers ---------------------------------------
def _rms(x):
    # RMSNorm over last dim, no affine.
    ms = jnp.mean(x * x, axis=-1, keepdims=True)
    return x * jax.lax.rsqrt(ms + NORM_EPS)


# ----------------------------- kernel ----------------------------------------
def _gate_retention_fused_kernel(x_ref, c_ref, w_qkvg_ref, w_gt_ref, w_out_ref,
                                 y_ref, qkvg_scr, g_scr, o_scr, *,
                                 seq_len, batch_tile):
    T = seq_len
    BT = batch_tile
    M, C = x_ref.shape            # M = BT * T
    H, D = N_HEADS, HEAD_DIM
    bf16 = jnp.bfloat16

    x = x_ref[...]                # (M, C) f32
    xc = x + c_ref[...]

    # ---- fused Q|K|V|G projection: one (M,C)@(C,4C)=128-lane MXU matmul ------
    # bf16 operands, f32 accumulation (elementwise math stays f32).
    qkvg = jnp.dot(x.astype(bf16), w_qkvg_ref[...],
                   preferred_element_type=jnp.float32)          # (M, 4C)

    scale = float(D) ** -0.5
    # Scale folded into q once (saves an (T,T) multiply per head per sequence).
    qkvg_scr[:, 0 * C:1 * C] = _rms(qkvg[:, 0 * C:1 * C]) * scale
    qkvg_scr[:, 1 * C:2 * C] = _rms(qkvg[:, 1 * C:2 * C])
    qkvg_scr[:, 2 * C:3 * C] = _rms(qkvg[:, 2 * C:3 * C])
    qkvg_scr[:, 3 * C:4 * C] = qkvg[:, 3 * C:4 * C]             # raw gate for swiglu

    # ---- gate logits -> stable logsigmoid -> inclusive cumsum over time ------
    gt = jnp.dot(xc.astype(bf16), w_gt_ref[...],
                 preferred_element_type=jnp.float32)            # (M, H)
    gl = (jnp.minimum(gt, 0.0)
          - jnp.log(1.0 + jnp.exp(-jnp.abs(gt)))) / GATE_LOGIT_NORMALIZER  # <= 0

    # Hillis-Steele inclusive scan along time (sublane axis) via XLU rolls.
    # `pos >= s` masking keeps each length-T sequence (segment) independent, so
    # one scan covers all BT sequences in the block. No (T,T) matrix, no MXU op.
    pos = jax.lax.broadcasted_iota(jnp.int32, (M, H), 0) % T
    G = gl
    s = 1
    while s < T:
        shifted = pltpu.roll(G, shift=s, axis=0)
        G = G + jnp.where(pos >= s, shifted, 0.0)
        s *= 2
    g_scr[...] = G                                              # (M, H)

    # ---- causal geometry built once per grid step (shared by all b, h) -------
    row = jax.lax.broadcasted_iota(jnp.int32, (T, T), 0)        # query index t
    col = jax.lax.broadcasted_iota(jnp.int32, (T, T), 1)        # key index s
    causal = col <= row
    neg_big = jnp.float32(-1e30)

    # ---- gated retention per sequence -----------------------------------------
    # fori_loop over the BT sequences bounds the (T,T) temporary live ranges to
    # one sequence at a time. Heads stay a static H=4 loop so lane slices stay
    # static (D=8); each head writes its subln output directly into o_scr
    # (no jnp.concatenate / lane relayout).
    def _per_sequence(b, carry):
        start = b * T
        if T % 8 == 0:
            start = pl.multiple_of(start, 8)
        rows = pl.ds(start, T)

        G_b = g_scr[rows, :]                                    # (T, H)
        G_bT = jnp.transpose(G_b)                               # (H, T)

        for h in range(H):
            qh = qkvg_scr[rows, 0 * C + h * D:0 * C + (h + 1) * D]   # (T, D), * D^-0.5
            kh = qkvg_scr[rows, 1 * C + h * D:1 * C + (h + 1) * D]
            vh = qkvg_scr[rows, 2 * C + h * D:2 * C + (h + 1) * D]

            # decay[t, s] = exp(G[t] - G[s]) for s <= t, else 0.
            # Mask BEFORE exp: diff >= 0 for s > t (G is non-increasing).
            diff = G_b[:, h:h + 1] - G_bT[h:h + 1, :]                # (T, T)
            decay = jnp.exp(jnp.where(causal, diff, neg_big))

            scores = jax.lax.dot_general(
                qh.astype(bf16), kh.astype(bf16),
                (((1,), (1,)), ((), ())),
                preferred_element_type=jnp.float32)                  # (T, T)
            attn = scores * decay
            oh = jnp.dot(attn.astype(bf16), vh.astype(bf16),
                         preferred_element_type=jnp.float32)         # (T, D)
            o_scr[rows, h * D:(h + 1) * D] = _rms(oh)                # subln over head_dim
        return carry

    jax.lax.fori_loop(0, BT, _per_sequence, 0)

    # ---- swiglu(g, o) = silu(g) * o, then output projection -------------------
    g = qkvg_scr[:, 3 * C:4 * C]
    o = o_scr[...]
    sig_g = pl.reciprocal(1.0 + jnp.exp(-g), approx=True)       # EUP exp + recip
    hgo = (g * sig_g) * o
    y_ref[...] = jnp.dot(hgo.astype(bf16), w_out_ref[...],
                         preferred_element_type=jnp.float32)


# ----------------------------- wrappers --------------------------------------
def prepare_weights(params):
    """One-time weight prep (transpose + concat + bf16 cast) outside the hot path."""
    def w(p):
        return jnp.asarray(p, jnp.float32).T.astype(jnp.bfloat16)
    w_qkvg = jnp.concatenate(
        [w(params["q_proj"]), w(params["k_proj"]),
         w(params["v_proj"]), w(params["g_proj"])], axis=1)       # (DIM, 4*DIM) bf16
    w_gt = w(params["gt_proj"])                                   # (DIM, H) bf16
    w_out = w(params["out_proj"])                                 # (DIM, DIM) bf16
    return w_qkvg, w_gt, w_out


def _pick_batch_tile(batch, seq_len, feat):
    # Largest divisor of `batch` that (a) keeps >= 2 parallel grid steps when
    # batch >= 2 (v7x: two TensorCores) and (b) keeps the per-step activation
    # block modest. Per-step overhead (~0.35us) is amortized over BT sequences.
    byte_cap = 2 * 1024 * 1024
    best = 1
    for bt in range(1, batch + 1):
        if batch % bt:
            continue
        if batch >= 2 and batch // bt < 2:
            continue
        if bt * seq_len * feat * 4 > byte_cap:
            continue
        best = bt
    return best


def gate_retention_forward(x, c, w_qkvg, w_gt, w_out, *, batch_tile=None):
    """x, c: (B, T, DIM) float32. Returns (B, T, DIM) float32."""
    B, T, C = x.shape
    assert C == DIM
    assert T <= CHUNK_SIZE  # TODO(synk): add chunked recurrence for T > chunk_size.

    bt = _pick_batch_tile(B, T, C) if batch_tile is None else int(batch_tile)
    assert B % bt == 0, "batch_tile must divide batch"
    nb = B // bt
    m_blk = bt * T

    # Contiguous (B,T,C)->(B*T,C) reshape is free (metadata only); keeps every
    # Pallas block a plain 2-D sublane-dense slab.
    x2 = jnp.asarray(x, jnp.float32).reshape(B * T, C)
    c2 = jnp.asarray(c, jnp.float32).reshape(B * T, C)

    flops = int(2 * B * T * C * (4 * C + N_HEADS + C)
                + 4 * B * N_HEADS * T * T * HEAD_DIM
                + 8 * B * N_HEADS * T * T)
    transcendentals = int(B * (N_HEADS * T * T + N_HEADS * T + T * C))
    bytes_accessed = int(4 * 3 * B * T * C
                         + 2 * (4 * C * C + C * N_HEADS + C * C))

    kernel = functools.partial(_gate_retention_fused_kernel,
                               seq_len=T, batch_tile=bt)

    y2 = pl.pallas_call(
        kernel,
        out_shape=jax.ShapeDtypeStruct((B * T, C), jnp.float32),
        grid_spec=pltpu.PrefetchScalarGridSpec(
            num_scalar_prefetch=0,
            grid=(nb,),
            in_specs=[
                pl.BlockSpec((m_blk, C), lambda i: (i, 0)),        # x slab
                pl.BlockSpec((m_blk, C), lambda i: (i, 0)),        # c slab
                pl.BlockSpec((C, 4 * C), lambda i: (0, 0)),        # W_qkvg (resident)
                pl.BlockSpec((C, N_HEADS), lambda i: (0, 0)),      # W_gt   (resident)
                pl.BlockSpec((C, C), lambda i: (0, 0)),            # W_out  (resident)
            ],
            out_specs=pl.BlockSpec((m_blk, C), lambda i: (i, 0)),
            scratch_shapes=[
                pltpu.VMEM((m_blk, 4 * C), jnp.float32),   # q|k|v|g post-norm (128 lanes)
                pltpu.VMEM((m_blk, N_HEADS), jnp.float32),  # cumulative gate G
                pltpu.VMEM((m_blk, C), jnp.float32),        # per-head retention outputs
            ],
        ),
        compiler_params=pltpu.CompilerParams(
            dimension_semantics=("parallel",)),
        cost_estimate=pl.CostEstimate(flops=flops,
                                      transcendentals=transcendentals,
                                      bytes_accessed=bytes_accessed),
    )(x2, c2, w_qkvg, w_gt, w_out)
    return y2.reshape(B, T, C)


# ----------------------------- pure-JAX reference ----------------------------
def gate_retention_reference(x, c, params):
    """Straight-line f32 reference of the PyTorch forward (for a sanity check)."""
    B, T, C = x.shape
    H, D = N_HEADS, HEAD_DIM
    rms = lambda t: t * jax.lax.rsqrt(jnp.mean(t * t, -1, keepdims=True) + NORM_EPS)

    q = rms(x @ params["q_proj"].T)
    k = rms(x @ params["k_proj"].T)
    v = rms(x @ params["v_proj"].T)
    g = x @ params["g_proj"].T
    gt = (x + c) @ params["gt_proj"].T                            # (B, T, H)

    qr = q.reshape(B, T, H, D).transpose(0, 2, 1, 3)
    kr = k.reshape(B, T, H, D).transpose(0, 2, 1, 3)
    vr = v.reshape(B, T, H, D).transpose(0, 2, 1, 3)

    gl = jax.nn.log_sigmoid(gt) / GATE_LOGIT_NORMALIZER           # (B, T, H)
    G = jnp.cumsum(gl, axis=1).transpose(0, 2, 1)                 # (B, H, T)
    decay = jnp.exp(G[..., :, None] - G[..., None, :])            # (B, H, T, T)
    mask = jnp.tril(jnp.ones((T, T), bool))
    decay = jnp.where(mask, decay, 0.0)

    scores = jnp.einsum("bhtd,bhsd->bhts", qr, kr) * (float(D) ** -0.5)
    o = jnp.einsum("bhts,bhsd->bhtd", scores * decay, vr)
    o = rms(o)                                                    # subln over head_dim
    o = o.transpose(0, 2, 1, 3).reshape(B, T, C)
    o = jax.nn.silu(g) * o
    return o @ params["out_proj"].T


# ----------------------------- main ------------------------------------------
if __name__ == "__main__":
    key = jax.random.PRNGKey(0)
    kx, kc, k1, k2, k3, k4, k5, k6 = jax.random.split(key, 8)

    B, T = 4, 16
    x = jax.random.normal(kx, (B, T, DIM), jnp.float32)
    c = jax.random.normal(kc, (B, T, DIM), jnp.float32)

    s = 0.05
    params = {
        "q_proj": s * jax.random.normal(k1, (DIM, DIM), jnp.float32),
        "k_proj": s * jax.random.normal(k2, (DIM, DIM), jnp.float32),
        "v_proj": s * jax.random.normal(k3, (DIM, DIM), jnp.float32),
        "g_proj": s * jax.random.normal(k4, (DIM, DIM), jnp.float32),
        "gt_proj": s * jax.random.normal(k5, (N_HEADS, DIM), jnp.float32),
        "out_proj": s * jax.random.normal(k6, (DIM, DIM), jnp.float32),
    }

    # Weight prep happens once, outside the hot path.
    w_qkvg, w_gt, w_out = jax.block_until_ready(prepare_weights(params))

    fwd = jax.jit(gate_retention_forward)
    y = jax.block_until_ready(fwd(x, c, w_qkvg, w_gt, w_out))

    assert y.shape == (B, T, DIM) and y.dtype == jnp.float32
    assert bool(jnp.all(jnp.isfinite(y)))

    # Sanity check vs. pure-JAX f32 reference (kernel uses bf16 MXU operands).
    y_ref = jax.block_until_ready(gate_retention_reference(x, c, params))
    max_err = float(jnp.max(jnp.abs(y - y_ref)))
    assert max_err < 3e-2, f"max abs err vs reference = {max_err}"

    print("KERNEL_OK")
</pallas_src>

<mosaic_0001>
module attributes {stable_mosaic.version = 11 : i64} {
  func.func @_gate_retention_fused_kernel(%arg0: i32, %arg1: memref<32x32xf32, #tpu.memory_space<vmem>>, %arg2: memref<32x32xf32, #tpu.memory_space<vmem>>, %arg3: memref<32x128xbf16, #tpu.memory_space<vmem>>, %arg4: memref<32x4xbf16, #tpu.memory_space<vmem>>, %arg5: memref<32x32xbf16, #tpu.memory_space<vmem>>, %arg6: memref<32x32xf32, #tpu.memory_space<vmem>>, %arg7: memref<32x128xf32, #tpu.memory_space<vmem>>, %arg8: memref<32x4xf32, #tpu.memory_space<vmem>>, %arg9: memref<32x32xf32, #tpu.memory_space<vmem>>) attributes {dimension_semantics = [#tpu.dimension_semantics<parallel>], iteration_bounds = array<i64: 2>, scalar_prefetch = 0 : i64, scratch_operands = 3 : i64, tpu.core_type = #tpu.core_type<tc>, window_params = [{transform_indices = @transform_0, window_bounds = array<i64: 32, 32>}, {transform_indices = @transform_1, window_bounds = array<i64: 32, 32>}, {pipeline_mode = #tpu.pipeline_mode<synchronous>, transform_indices = @transform_2, window_bounds = array<i64: 32, 128>}, {pipeline_mode = #tpu.pipeline_mode<synchronous>, transform_indices = @transform_3, window_bounds = array<i64: 32, 4>}, {pipeline_mode = #tpu.pipeline_mode<synchronous>, transform_indices = @transform_4, window_bounds = array<i64: 32, 32>}, {transform_indices = @transform_5, window_bounds = array<i64: 32, 32>}]} {
    %c0 = arith.constant 0 : index
    %c0_0 = arith.constant 0 : index
    %0 = vector.load %arg1[%c0, %c0_0] : memref<32x32xf32, #tpu.memory_space<vmem>>, vector<32x32xf32>
    %c0_1 = arith.constant 0 : index
    %c0_2 = arith.constant 0 : index
    %1 = vector.load %arg2[%c0_1, %c0_2] : memref<32x32xf32, #tpu.memory_space<vmem>>, vector<32x32xf32>
    %2 = arith.addf %0, %1 : vector<32x32xf32>
    %3 = arith.truncf %0 : vector<32x32xf32> to vector<32x32xbf16>
    %c0_3 = arith.constant 0 : index
    %c0_4 = arith.constant 0 : index
    %4 = vector.load %arg3[%c0_3, %c0_4] : memref<32x128xbf16, #tpu.memory_space<vmem>>, vector<32x128xbf16>
    %cst = arith.constant dense<0.000000e+00> : vector<32x128xf32>
    %5 = tpu.matmul %3, %4, %cst {dimension_numbers = #tpu.dot_dimension_numbers<[1], [0], [0], [1], [0, 0, 1, 1], [], []>} : vector<32x32xbf16>, vector<32x128xbf16>, vector<32x128xf32> -> vector<32x128xf32>
    %6 = vector.extract_strided_slice %5 {offsets = [0, 0], sizes = [32, 32], strides = [1, 1]} : vector<32x128xf32> to vector<32x32xf32>
    %7 = arith.mulf %6, %6 : vector<32x32xf32>
    %cst_5 = arith.constant dense<0.000000e+00> : vector<32xf32>
    %8 = vector.multi_reduction <add>, %7, %cst_5 [1] : vector<32x32xf32> to vector<32xf32>
    %9 = vector.shape_cast %8 : vector<32xf32> to vector<32x1xf32>
    %cst_6 = arith.constant 3.200000e+01 : f32
    %10 = vector.broadcast %cst_6 : f32 to vector<32x1xf32>
    %11 = arith.divf %9, %10 : vector<32x1xf32>
    %cst_7 = arith.constant 9.99999997E-7 : f32
    %12 = vector.broadcast %cst_7 : f32 to vector<32x1xf32>
    %13 = arith.addf %11, %12 : vector<32x1xf32>
    %14 = math.rsqrt %13 : vector<32x1xf32>
    %15 = vector.broadcast %14 : vector<32x1xf32> to vector<32x32xf32>
    %16 = arith.mulf %6, %15 : vector<32x32xf32>
    %cst_8 = arith.constant 0.353553385 : f32
    %17 = vector.broadcast %cst_8 : f32 to vector<32x32xf32>
    %18 = arith.mulf %16, %17 : vector<32x32xf32>
    %c0_9 = arith.constant 0 : index
    %c0_10 = arith.constant 0 : index
    %19 = vector.load %arg7[%c0_9, %c0_10] : memref<32x128xf32, #tpu.memory_space<vmem>>, vector<32x32xf32>
    tpu.vector_store %arg7[%c0_9, %c0_10], %18 {strides = array<i32>} : memref<32x128xf32, #tpu.memory_space<vmem>>, vector<32x32xf32>,
    %20 = vector.extract_strided_slice %5 {offsets = [0, 32], sizes = [32, 32], strides = [1, 1]} : vector<32x128xf32> to vector<32x32xf32>
    %21 = arith.mulf %20, %20 : vector<32x32xf32>
    %cst_11 = arith.constant dense<0.000000e+00> : vector<32xf32>
    %22 = vector.multi_reduction <add>, %21, %cst_11 [1] : vector<32x32xf32> to vector<32xf32>
    %23 = vector.shape_cast %22 : vector<32xf32> to vector<32x1xf32>
    %cst_12 = arith.constant 3.200000e+01 : f32
    %24 = vector.broadcast %cst_12 : f32 to vector<32x1xf32>
    %25 = arith.divf %23, %24 : vector<32x1xf32>
    %cst_13 = arith.constant 9.99999997E-7 : f32
    %26 = vector.broadcast %cst_13 : f32 to vector<32x1xf32>
    %27 = arith.addf %25, %26 : vector<32x1xf32>
    %28 = math.rsqrt %27 : vector<32x1xf32>
    %29 = vector.broadcast %28 : vector<32x1xf32> to vector<32x32xf32>
    %30 = arith.mulf %20, %29 : vector<32x32xf32>
    %c0_14 = arith.constant 0 : index
    %c32 = arith.constant 32 : index
    %31 = vector.load %arg7[%c0_14, %c32] : memref<32x128xf32, #tpu.memory_space<vmem>>, vector<32x32xf32>
    tpu.vector_store %arg7[%c0_14, %c32], %30 {strides = array<i32>} : memref<32x128xf32, #tpu.memory_space<vmem>>, vector<32x32xf32>,
    %32 = vector.extract_strided_slice %5 {offsets = [0, 64], sizes = [32, 32], strides = [1, 1]} : vector<32x128xf32> to vector<32x32xf32>
    %33 = arith.mulf %32, %32 : vector<32x32xf32>
    %cst_15 = arith.constant dense<0.000000e+00> : vector<32xf32>
    %34 = vector.multi_reduction <add>, %33, %cst_15 [1] : vector<32x32xf32> to vector<32xf32>
    %35 = vector.shape_cast %34 : vector<32xf32> to vector<32x1xf32>
    %cst_16 = arith.constant 3.200000e+01 : f32
    %36 = vector.broadcast %cst_16 : f32 to vector<32x1xf32>
    %37 = arith.divf %35, %36 : vector<32x1xf32>
    %cst_17 = arith.constant 9.99999997E-7 : f32
    %38 = vector.broadcast %cst_17 : f32 to vector<32x1xf32>
    %39 = arith.addf %37, %38 : vector<32x1xf32>
    %40 = math.rsqrt %39 : vector<32x1xf32>
    %41 = vector.broadcast %40 : vector<32x1xf32> to vector<32x32xf32>
    %42 = arith.mulf %32, %41 : vector<32x32xf32>
    %c0_18 = arith.constant 0 : index
    %c64 = arith.constant 64 : index
    %43 = vector.load %arg7[%c0_18, %c64] : memref<32x128xf32, #tpu.memory_space<vmem>>, vector<32x32xf32>
    tpu.vector_store %arg7[%c0_18, %c64], %42 {strides = array<i32>} : memref<32x128xf32, #tpu.memory_space<vmem>>, vector<32x32xf32>,
    %44 = vector.extract_strided_slice %5 {offsets = [0, 96], sizes = [32, 32], strides = [1, 1]} : vector<32x128xf32> to vector<32x32xf32>
    %c0_19 = arith.constant 0 : index
    %c96 = arith.constant 96 : index
    %45 = vector.load %arg7[%c0_19, %c96] : memref<32x128xf32, #tpu.memory_space<vmem>>, vector<32x32xf32>
    tpu.vector_store %arg7[%c0_19, %c96], %44 {strides = array<i32>} : memref<32x128xf32, #tpu.memory_space<vmem>>, vector<32x32xf32>,
    %46 = arith.truncf %2 : vector<32x32xf32> to vector<32x32xbf16>
    %c0_20 = arith.constant 0 : index
    %c0_21 = arith.constant 0 : index
    %47 = vector.load %arg4[%c0_20, %c0_21] : memref<32x4xbf16, #tpu.memory_space<vmem>>, vector<32x4xbf16>
    %cst_22 = arith.constant dense<0.000000e+00> : vector<32x4xf32>
    %48 = tpu.matmul %46, %47, %cst_22 {dimension_numbers = #tpu.dot_dimension_numbers<[1], [0], [0], [1], [0, 0, 1, 1], [], []>} : vector<32x32xbf16>, vector<32x4xbf16>, vector<32x4xf32> -> vector<32x4xf32>
    %cst_23 = arith.constant 0.000000e+00 : f32
    %49 = vector.broadcast %cst_23 : f32 to vector<32x4xf32>
    %50 = arith.minimumf %48, %49 : vector<32x4xf32>
    %51 = math.absf %48 : vector<32x4xf32>
    %cst_24 = arith.constant 0.000000e+00 : f32
    %52 = vector.broadcast %cst_24 : f32 to vector<32x4xf32>
    %53 = arith.subf %52, %51 : vector<32x4xf32>
    %54 = math.exp %53 : vector<32x4xf32>
    %cst_25 = arith.constant 1.000000e+00 : f32
    %55 = vector.broadcast %cst_25 : f32 to vector<32x4xf32>
    %56 = arith.addf %55, %54 : vector<32x4xf32>
    %57 = math.log %56 : vector<32x4xf32>
    %58 = arith.subf %50, %57 : vector<32x4xf32>
    %cst_26 = arith.constant 1.600000e+01 : f32
    %59 = vector.broadcast %cst_26 : f32 to vector<32x4xf32>
    %60 = arith.divf %58, %59 : vector<32x4xf32>
    %61 = tpu.iota {dimensions = array<i32: 0>} : vector<32x4xi32>
    %c16_i32 = arith.constant 16 : i32
    %c0_i32 = arith.constant 0 : i32
    %62 = arith.cmpi eq, %c16_i32, %c0_i32 : i32
    %c1_i32 = arith.constant 1 : i32
    %63 = arith.select %62, %c1_i32, %c16_i32 : i32
    %64 = vector.broadcast %63 : i32 to vector<32x4xi32>
    %65 = arith.remsi %61, %64 : vector<32x4xi32>
    %c0_i32_27 = arith.constant 0 : i32
    %66 = vector.broadcast %c0_i32_27 : i32 to vector<32x4xi32>
    %67 = arith.cmpi ne, %65, %66 : vector<32x4xi32>
    %c0_i32_28 = arith.constant 0 : i32
    %68 = vector.broadcast %c0_i32_28 : i32 to vector<32x4xi32>
    %69 = arith.cmpi slt, %65, %68 : vector<32x4xi32>
    %c0_i32_29 = arith.constant 0 : i32
    %70 = arith.cmpi slt, %63, %c0_i32_29 : i32
    %71 = vector.broadcast %70 : i1 to vector<32x4xi1>
    %72 = vector.broadcast %71 : vector<32x4xi1> to vector<32x4xi1>
    %73 = arith.xori %69, %72 : vector<32x4xi1>
    %74 = arith.andi %73, %67 : vector<32x4xi1>
    %75 = vector.broadcast %63 : i32 to vector<32x4xi32>
    %76 = arith.addi %65, %75 : vector<32x4xi32>
    %77 = arith.select %74, %76, %65 : vector<32x4xi1>, vector<32x4xi32>
    %c1_i32_30 = arith.constant 1 : i32
    %78 = tpu.dynamic_rotate %60 by %c1_i32_30 dim 0 : vector<32x4xf32>, i32 -> vector<32x4xf32>
    %c1_i32_31 = arith.constant 1 : i32
    %79 = vector.broadcast %c1_i32_31 : i32 to vector<32x4xi32>
    %80 = arith.cmpi sge, %77, %79 : vector<32x4xi32>
    %cst_32 = arith.constant 0.000000e+00 : f32
    %81 = vector.broadcast %cst_32 : f32 to vector<32x4xf32>
    %82 = arith.select %80, %78, %81 : vector<32x4xi1>, vector<32x4xf32>
    %83 = arith.addf %60, %82 : vector<32x4xf32>
    %c2_i32 = arith.constant 2 : i32
    %84 = tpu.dynamic_rotate %83 by %c2_i32 dim 0 : vector<32x4xf32>, i32 -> vector<32x4xf32>
    %c2_i32_33 = arith.constant 2 : i32
    %85 = vector.broadcast %c2_i32_33 : i32 to vector<32x4xi32>
    %86 = arith.cmpi sge, %77, %85 : vector<32x4xi32>
    %cst_34 = arith.constant 0.000000e+00 : f32
    %87 = vector.broadcast %cst_34 : f32 to vector<32x4xf32>
    %88 = arith.select %86, %84, %87 : vector<32x4xi1>, vector<32x4xf32>
    %89 = arith.addf %83, %88 : vector<32x4xf32>
    %c4_i32 = arith.constant 4 : i32
    %90 = tpu.dynamic_rotate %89 by %c4_i32 dim 0 : vector<32x4xf32>, i32 -> vector<32x4xf32>
    %c4_i32_35 = arith.constant 4 : i32
    %91 = vector.broadcast %c4_i32_35 : i32 to vector<32x4xi32>
    %92 = arith.cmpi sge, %77, %91 : vector<32x4xi32>
    %cst_36 = arith.constant 0.000000e+00 : f32
    %93 = vector.broadcast %cst_36 : f32 to vector<32x4xf32>
    %94 = arith.select %92, %90, %93 : vector<32x4xi1>, vector<32x4xf32>
    %95 = arith.addf %89, %94 : vector<32x4xf32>
    %c8_i32 = arith.constant 8 : i32
    %96 = tpu.dynamic_rotate %95 by %c8_i32 dim 0 : vector<32x4xf32>, i32 -> vector<32x4xf32>
    %c8_i32_37 = arith.constant 8 : i32
    %97 = vector.broadcast %c8_i32_37 : i32 to vector<32x4xi32>
    %98 = arith.cmpi sge, %77, %97 : vector<32x4xi32>
    %cst_38 = arith.constant 0.000000e+00 : f32
    %99 = vector.broadcast %cst_38 : f32 to vector<32x4xf32>
    %100 = arith.select %98, %96, %99 : vector<32x4xi1>, vector<32x4xf32>
    %101 = arith.addf %95, %100 : vector<32x4xf32>
    %c0_39 = arith.constant 0 : index
    %c0_40 = arith.constant 0 : index
    %102 = vector.load %arg8[%c0_39, %c0_40] : memref<32x4xf32, #tpu.memory_space<vmem>>, vector<32x4xf32>
    tpu.vector_store %arg8[%c0_39, %c0_40], %101 {strides = array<i32>} : memref<32x4xf32, #tpu.memory_space<vmem>>, vector<32x4xf32>,
    %103 = tpu.iota {dimensions = array<i32: 0>} : vector<16x16xi32>
    %104 = tpu.iota {dimensions = array<i32: 1>} : vector<16x16xi32>
    %105 = arith.cmpi sle, %104, %103 : vector<16x16xi32>
    %cst_41 = arith.constant -1.000000e+30 : f32
    %c0_i32_42 = arith.constant 0 : i32
    %c2_i32_43 = arith.constant 2 : i32
    %106 = arith.addi %c0_i32_42, %c2_i32_43 : i32
    %c1_i32_44 = arith.constant 1 : i32
    scf.for %arg10 = %c0_i32_42 to %106 step %c1_i32_44  : i32 {
      %c16_i32_57 = arith.constant 16 : i32
      %121 = arith.muli %arg10, %c16_i32_57 : i32
      %122 = tpu.assume_multiple %121, 8 : i32
      %123 = arith.index_cast %122 : i32 to index
      %c0_58 = arith.constant 0 : index
      %124 = vector.load %arg8[%123, %c0_58] : memref<32x4xf32, #tpu.memory_space<vmem>>, vector<16x4xf32>
      %125 = tpu.transpose %124, [1, 0] : vector<16x4xf32> -> vector<4x16xf32>
      %126 = arith.index_cast %122 : i32 to index
      %c0_59 = arith.constant 0 : index
      %127 = vector.load %arg7[%126, %c0_59] : memref<32x128xf32, #tpu.memory_space<vmem>>, vector<16x8xf32>
      %128 = arith.index_cast %122 : i32 to index
      %c32_60 = arith.constant 32 : index
      %129 = vector.load %arg7[%128, %c32_60] : memref<32x128xf32, #tpu.memory_space<vmem>>, vector<16x8xf32>
      %130 = arith.index_cast %122 : i32 to index
      %c64_61 = arith.constant 64 : index
      %131 = vector.load %arg7[%130, %c64_61] : memref<32x128xf32, #tpu.memory_space<vmem>>, vector<16x8xf32>
      %132 = vector.extract_strided_slice %124 {offsets = [0, 0], sizes = [16, 1], strides = [1, 1]} : vector<16x4xf32> to vector<16x1xf32>
      %133 = vector.extract_strided_slice %125 {offsets = [0, 0], sizes = [1, 16], strides = [1, 1]} : vector<4x16xf32> to vector<1x16xf32>
      %134 = vector.broadcast %132 : vector<16x1xf32> to vector<16x16xf32>
      %135 = vector.broadcast %133 : vector<1x16xf32> to vector<16x16xf32>
      %136 = arith.subf %134, %135 : vector<16x16xf32>
      %137 = vector.broadcast %cst_41 : f32 to vector<16x16xf32>
      %138 = arith.select %105, %136, %137 : vector<16x16xi1>, vector<16x16xf32>
      %139 = math.exp %138 : vector<16x16xf32>
      %140 = arith.truncf %127 : vector<16x8xf32> to vector<16x8xbf16>
      %141 = arith.truncf %129 : vector<16x8xf32> to vector<16x8xbf16>
      %cst_62 = arith.constant dense<0.000000e+00> : vector<16x16xf32>
      %142 = tpu.matmul %140, %141, %cst_62 {dimension_numbers = #tpu.dot_dimension_numbers<[1], [1], [0], [0], [0, 0, 1, 0], [], []>} : vector<16x8xbf16>, vector<16x8xbf16>, vector<16x16xf32> -> vector<16x16xf32>
      %143 = arith.mulf %142, %139 : vector<16x16xf32>
      %144 = arith.truncf %143 : vector<16x16xf32> to vector<16x16xbf16>
      %145 = arith.truncf %131 : vector<16x8xf32> to vector<16x8xbf16>
      %cst_63 = arith.constant dense<0.000000e+00> : vector<16x8xf32>
      %146 = tpu.matmul %144, %145, %cst_63 {dimension_numbers = #tpu.dot_dimension_numbers<[1], [0], [0], [1], [0, 0, 1, 1], [], []>} : vector<16x16xbf16>, vector<16x8xbf16>, vector<16x8xf32> -> vector<16x8xf32>
      %147 = arith.mulf %146, %146 : vector<16x8xf32>
      %cst_64 = arith.constant dense<0.000000e+00> : vector<16xf32>
      %148 = vector.multi_reduction <add>, %147, %cst_64 [1] : vector<16x8xf32> to vector<16xf32>
      %149 = vector.shape_cast %148 : vector<16xf32> to vector<16x1xf32>
      %cst_65 = arith.constant 8.000000e+00 : f32
      %150 = vector.broadcast %cst_65 : f32 to vector<16x1xf32>
      %151 = arith.divf %149, %150 : vector<16x1xf32>
      %cst_66 = arith.constant 9.99999997E-7 : f32
      %152 = vector.broadcast %cst_66 : f32 to vector<16x1xf32>
      %153 = arith.addf %151, %152 : vector<16x1xf32>
      %154 = math.rsqrt %153 : vector<16x1xf32>
      %155 = vector.broadcast %154 : vector<16x1xf32> to vector<16x8xf32>
      %156 = arith.mulf %146, %155 : vector<16x8xf32>
      %157 = arith.index_cast %122 : i32 to index
      %c0_67 = arith.constant 0 : index
      %158 = vector.load %arg9[%157, %c0_67] : memref<32x32xf32, #tpu.memory_space<vmem>>, vector<16x8xf32>
      tpu.vector_store %arg9[%157, %c0_67], %156 {strides = array<i32>} : memref<32x32xf32, #tpu.memory_space<vmem>>, vector<16x8xf32>,
      %159 = arith.index_cast %122 : i32 to index
      %c8 = arith.constant 8 : index
      %160 = vector.load %arg7[%159, %c8] : memref<32x128xf32, #tpu.memory_space<vmem>>, vector<16x8xf32>
      %161 = arith.index_cast %122 : i32 to index
      %c40 = arith.constant 40 : index
      %162 = vector.load %arg7[%161, %c40] : memref<32x128xf32, #tpu.memory_space<vmem>>, vector<16x8xf32>
      %163 = arith.index_cast %122 : i32 to index
      %c72 = arith.constant 72 : index
      %164 = vector.load %arg7[%163, %c72] : memref<32x128xf32, #tpu.memory_space<vmem>>, vector<16x8xf32>
      %165 = vector.extract_strided_slice %124 {offsets = [0, 1], sizes = [16, 1], strides = [1, 1]} : vector<16x4xf32> to vector<16x1xf32>
      %166 = vector.extract_strided_slice %125 {offsets = [1, 0], sizes = [1, 16], strides = [1, 1]} : vector<4x16xf32> to vector<1x16xf32>
      %167 = vector.broadcast %165 : vector<16x1xf32> to vector<16x16xf32>
      %168 = vector.broadcast %166 : vector<1x16xf32> to vector<16x16xf32>
      %169 = arith.subf %167, %168 : vector<16x16xf32>
      %170 = vector.broadcast %cst_41 : f32 to vector<16x16xf32>
      %171 = arith.select %105, %169, %170 : vector<16x16xi1>, vector<16x16xf32>
      %172 = math.exp %171 : vector<16x16xf32>
      %173 = arith.truncf %160 : vector<16x8xf32> to vector<16x8xbf16>
      %174 = arith.truncf %162 : vector<16x8xf32> to vector<16x8xbf16>
      %cst_68 = arith.constant dense<0.000000e+00> : vector<16x16xf32>
      %175 = tpu.matmul %173, %174, %cst_68 {dimension_numbers = #tpu.dot_dimension_numbers<[1], [1], [0], [0], [0, 0, 1, 0], [], []>} : vector<16x8xbf16>, vector<16x8xbf16>, vector<16x16xf32> -> vector<16x16xf32>
      %176 = arith.mulf %175, %172 : vector<16x16xf32>
      %177 = arith.truncf %176 : vector<16x16xf32> to vector<16x16xbf16>
      %178 = arith.truncf %164 : vector<16x8xf32> to vector<16x8xbf16>
      %cst_69 = arith.constant dense<0.000000e+00> : vector<16x8xf32>
      %179 = tpu.matmul %177, %178, %cst_69 {dimension_numbers = #tpu.dot_dimension_numbers<[1], [0], [0], [1], [0, 0, 1, 1], [], []>} : vector<16x16xbf16>, vector<16x8xbf16>, vector<16x8xf32> -> vector<16x8xf32>
      %180 = arith.mulf %179, %179 : vector<16x8xf32>
      %cst_70 = arith.constant dense<0.000000e+00> : vector<16xf32>
      %181 = vector.multi_reduction <add>, %180, %cst_70 [1] : vector<16x8xf32> to vector<16xf32>
      %182 = vector.shape_cast %181 : vector<16xf32> to vector<16x1xf32>
      %cst_71 = arith.constant 8.000000e+00 : f32
      %183 = vector.broadcast %cst_71 : f32 to vector<16x1xf32>
      %184 = arith.divf %182, %183 : vector<16x1xf32>
      %cst_72 = arith.constant 9.99999997E-7 : f32
      %185 = vector.broadcast %cst_72 : f32 to vector<16x1xf32>
      %186 = arith.addf %184, %185 : vector<16x1xf32>
      %187 = math.rsqrt %186 : vector<16x1xf32>
      %188 = vector.broadcast %187 : vector<16x1xf32> to vector<16x8xf32>
      %189 = arith.mulf %179, %188 : vector<16x8xf32>
      %190 = arith.index_cast %122 : i32 to index
      %c8_73 = arith.constant 8 : index
      %191 = vector.load %arg9[%190, %c8_73] : memref<32x32xf32, #tpu.memory_space<vmem>>, vector<16x8xf32>
      tpu.vector_store %arg9[%190, %c8_73], %189 {strides = array<i32>} : memref<32x32xf32, #tpu.memory_space<vmem>>, vector<16x8xf32>,
      %192 = arith.index_cast %122 : i32 to index
      %c16 = arith.constant 16 : index
      %193 = vector.load %arg7[%192, %c16] : memref<32x128xf32, #tpu.memory_space<vmem>>, vector<16x8xf32>
      %194 = arith.index_cast %122 : i32 to index
      %c48 = arith.constant 48 : index
      %195 = vector.load %arg7[%194, %c48] : memref<32x128xf32, #tpu.memory_space<vmem>>, vector<16x8xf32>
      %196 = arith.index_cast %122 : i32 to index
      %c80 = arith.constant 80 : index
      %197 = vector.load %arg7[%196, %c80] : memref<32x128xf32, #tpu.memory_space<vmem>>, vector<16x8xf32>
      %198 = vector.extract_strided_slice %124 {offsets = [0, 2], sizes = [16, 1], strides = [1, 1]} : vector<16x4xf32> to vector<16x1xf32>
      %199 = vector.extract_strided_slice %125 {offsets = [2, 0], sizes = [1, 16], strides = [1, 1]} : vector<4x16xf32> to vector<1x16xf32>
      %200 = vector.broadcast %198 : vector<16x1xf32> to vector<16x16xf32>
      %201 = vector.broadcast %199 : vector<1x16xf32> to vector<16x16xf32>
      %202 = arith.subf %200, %201 : vector<16x16xf32>
      %203 = vector.broadcast %cst_41 : f32 to vector<16x16xf32>
      %204 = arith.select %105, %202, %203 : vector<16x16xi1>, vector<16x16xf32>
      %205 = math.exp %204 : vector<16x16xf32>
      %206 = arith.truncf %193 : vector<16x8xf32> to vector<16x8xbf16>
      %207 = arith.truncf %195 : vector<16x8xf32> to vector<16x8xbf16>
      %cst_74 = arith.constant dense<0.000000e+00> : vector<16x16xf32>
      %208 = tpu.matmul %206, %207, %cst_74 {dimension_numbers = #tpu.dot_dimension_numbers<[1], [1], [0], [0], [0, 0, 1, 0], [], []>} : vector<16x8xbf16>, vector<16x8xbf16>, vector<16x16xf32> -> vector<16x16xf32>
      %209 = arith.mulf %208, %205 : vector<16x16xf32>
      %210 = arith.truncf %209 : vector<16x16xf32> to vector<16x16xbf16>
      %211 = arith.truncf %197 : vector<16x8xf32> to vector<16x8xbf16>
      %cst_75 = arith.constant dense<0.000000e+00> : vector<16x8xf32>
      %212 = tpu.matmul %210, %211, %cst_75 {dimension_numbers = #tpu.dot_dimension_numbers<[1], [0], [0], [1], [0, 0, 1, 1], [], []>} : vector<16x16xbf16>, vector<16x8xbf16>, vector<16x8xf32> -> vector<16x8xf32>
      %213 = arith.mulf %212, %212 : vector<16x8xf32>
      %cst_76 = arith.constant dense<0.000000e+00> : vector<16xf32>
      %214 = vector.multi_reduction <add>, %213, %cst_76 [1] : vector<16x8xf32> to vector<16xf32>
      %215 = vector.shape_cast %214 : vector<16xf32> to vector<16x1xf32>
      %cst_77 = arith.constant 8.000000e+00 : f32
      %216 = vector.broadcast %cst_77 : f32 to vector<16x1xf32>
      %217 = arith.divf %215, %216 : vector<16x1xf32>
      %cst_78 = arith.constant 9.99999997E-7 : f32
      %218 = vector.broadcast %cst_78 : f32 to vector<16x1xf32>
      %219 = arith.addf %217, %218 : vector<16x1xf32>
      %220 = math.rsqrt %219 : vector<16x1xf32>
      %221 = vector.broadcast %220 : vector<16x1xf32> to vector<16x8xf32>
      %222 = arith.mulf %212, %221 : vector<16x8xf32>
      %223 = arith.index_cast %122 : i32 to index
      %c16_79 = arith.constant 16 : index
      %224 = vector.load %arg9[%223, %c16_79] : memref<32x32xf32, #tpu.memory_space<vmem>>, vector<16x8xf32>
      tpu.vector_store %arg9[%223, %c16_79], %222 {strides = array<i32>} : memref<32x32xf32, #tpu.memory_space<vmem>>, vector<16x8xf32>,
      %225 = arith.index_cast %122 : i32 to index
      %c24 = arith.constant 24 : index
      %226 = vector.load %arg7[%225, %c24] : memref<32x128xf32, #tpu.memory_space<vmem>>, vector<16x8xf32>
      %227 = arith.index_cast %122 : i32 to index
      %c56 = arith.constant 56 : index
      %228 = vector.load %arg7[%227, %c56] : memref<32x128xf32, #tpu.memory_space<vmem>>, vector<16x8xf32>
      %229 = arith.index_cast %122 : i32 to index
      %c88 = arith.constant 88 : index
      %230 = vector.load %arg7[%229, %c88] : memref<32x128xf32, #tpu.memory_space<vmem>>, vector<16x8xf32>
      %231 = vector.extract_strided_slice %124 {offsets = [0, 3], sizes = [16, 1], strides = [1, 1]} : vector<16x4xf32> to vector<16x1xf32>
      %232 = vector.extract_strided_slice %125 {offsets = [3, 0], sizes = [1, 16], strides = [1, 1]} : vector<4x16xf32> to vector<1x16xf32>
      %233 = vector.broadcast %231 : vector<16x1xf32> to vector<16x16xf32>
      %234 = vector.broadcast %232 : vector<1x16xf32> to vector<16x16xf32>
      %235 = arith.subf %233, %234 : vector<16x16xf32>
      %236 = vector.broadcast %cst_41 : f32 to vector<16x16xf32>
      %237 = arith.select %105, %235, %236 : vector<16x16xi1>, vector<16x16xf32>
      %238 = math.exp %237 : vector<16x16xf32>
      %239 = arith.truncf %226 : vector<16x8xf32> to vector<16x8xbf16>
      %240 = arith.truncf %228 : vector<16x8xf32> to vector<16x8xbf16>
      %cst_80 = arith.constant dense<0.000000e+00> : vector<16x16xf32>
      %241 = tpu.matmul %239, %240, %cst_80 {dimension_numbers = #tpu.dot_dimension_numbers<[1], [1], [0], [0], [0, 0, 1, 0], [], []>} : vector<16x8xbf16>, vector<16x8xbf16>, vector<16x16xf32> -> vector<16x16xf32>
      %242 = arith.mulf %241, %238 : vector<16x16xf32>
      %243 = arith.truncf %242 : vector<16x16xf32> to vector<16x16xbf16>
      %244 = arith.truncf %230 : vector<16x8xf32> to vector<16x8xbf16>
      %cst_81 = arith.constant dense<0.000000e+00> : vector<16x8xf32>
      %245 = tpu.matmul %243, %244, %cst_81 {dimension_numbers = #tpu.dot_dimension_numbers<[1], [0], [0], [1], [0, 0, 1, 1], [], []>} : vector<16x16xbf16>, vector<16x8xbf16>, vector<16x8xf32> -> vector<16x8xf32>
      %246 = arith.mulf %245, %245 : vector<16x8xf32>
      %cst_82 = arith.constant dense<0.000000e+00> : vector<16xf32>
      %247 = vector.multi_reduction <add>, %246, %cst_82 [1] : vector<16x8xf32> to vector<16xf32>
      %248 = vector.shape_cast %247 : vector<16xf32> to vector<16x1xf32>
      %cst_83 = arith.constant 8.000000e+00 : f32
      %249 = vector.broadcast %cst_83 : f32 to vector<16x1xf32>
      %250 = arith.divf %248, %249 : vector<16x1xf32>
      %cst_84 = arith.constant 9.99999997E-7 : f32
      %251 = vector.broadcast %cst_84 : f32 to vector<16x1xf32>
      %252 = arith.addf %250, %251 : vector<16x1xf32>
      %253 = math.rsqrt %252 : vector<16x1xf32>
      %254 = vector.broadcast %253 : vector<16x1xf32> to vector<16x8xf32>
      %255 = arith.mulf %245, %254 : vector<16x8xf32>
      %256 = arith.index_cast %122 : i32 to index
      %c24_85 = arith.constant 24 : index
      %257 = vector.load %arg9[%256, %c24_85] : memref<32x32xf32, #tpu.memory_space<vmem>>, vector<16x8xf32>
      tpu.vector_store %arg9[%256, %c24_85], %255 {strides = array<i32>} : memref<32x32xf32, #tpu.memory_space<vmem>>, vector<16x8xf32>,
    }
    %c2_i32_45 = arith.constant 2 : i32
    %c0_46 = arith.constant 0 : index
    %c96_47 = arith.constant 96 : index
    %107 = vector.load %arg7[%c0_46, %c96_47] : memref<32x128xf32, #tpu.memory_space<vmem>>, vector<32x32xf32>
    %c0_48 = arith.constant 0 : index
    %c0_49 = arith.constant 0 : index
    %108 = vector.load %arg9[%c0_48, %c0_49] : memref<32x32xf32, #tpu.memory_space<vmem>>, vector<32x32xf32>
    %cst_50 = arith.constant 0.000000e+00 : f32
    %109 = vector.broadcast %cst_50 : f32 to vector<32x32xf32>
    %110 = arith.subf %109, %107 : vector<32x32xf32>
    %111 = math.exp %110 : vector<32x32xf32>
    %cst_51 = arith.constant 1.000000e+00 : f32
    %112 = vector.broadcast %cst_51 : f32 to vector<32x32xf32>
    %113 = arith.addf %112, %111 : vector<32x32xf32>
    %114 = tpu.reciprocal %113 {approx = true} : vector<32x32xf32> -> vector<32x32xf32>
    %115 = arith.mulf %107, %114 : vector<32x32xf32>
    %116 = arith.mulf %115, %108 : vector<32x32xf32>
    %117 = arith.truncf %116 : vector<32x32xf32> to vector<32x32xbf16>
    %c0_52 = arith.constant 0 : index
    %c0_53 = arith.constant 0 : index
    %118 = vector.load %arg5[%c0_52, %c0_53] : memref<32x32xbf16, #tpu.memory_space<vmem>>, vector<32x32xbf16>
    %cst_54 = arith.constant dense<0.000000e+00> : vector<32x32xf32>
    %119 = tpu.matmul %117, %118, %cst_54 {dimension_numbers = #tpu.dot_dimension_numbers<[1], [0], [0], [1], [0, 0, 1, 1], [], []>} : vector<32x32xbf16>, vector<32x32xbf16>, vector<32x32xf32> -> vector<32x32xf32>
    %c0_55 = arith.constant 0 : index
    %c0_56 = arith.constant 0 : index
    %120 = vector.load %arg6[%c0_55, %c0_56] : memref<32x32xf32, #tpu.memory_space<vmem>>, vector<32x32xf32>
    tpu.vector_store %arg6[%c0_55, %c0_56], %119 {strides = array<i32>} : memref<32x32xf32, #tpu.memory_space<vmem>>, vector<32x32xf32>,
    return
  }
  func.func @transform_0(%arg0: i32) -> (i32, i32) {
    %c0_i32 = arith.constant 0 : i32
    %c0_i32_0 = arith.constant 0 : i32
    return %arg0, %c0_i32 : i32, i32
  }
  func.func @transform_1(%arg0: i32) -> (i32, i32) {
    %c0_i32 = arith.constant 0 : i32
    %c0_i32_0 = arith.constant 0 : i32
    return %arg0, %c0_i32 : i32, i32
  }
  func.func @transform_2(%arg0: i32) -> (i32, i32) {
    %c0_i32 = arith.constant 0 : i32
    %c0_i32_0 = arith.constant 0 : i32
    %c0_i32_1 = arith.constant 0 : i32
    return %c0_i32, %c0_i32_0 : i32, i32
  }
  func.func @transform_3(%arg0: i32) -> (i32, i32) {
    %c0_i32 = arith.constant 0 : i32
    %c0_i32_0 = arith.constant 0 : i32
    %c0_i32_1 = arith.constant 0 : i32
    return %c0_i32, %c0_i32_0 : i32, i32
  }
  func.func @transform_4(%arg0: i32) -> (i32, i32) {
    %c0_i32 = arith.constant 0 : i32
    %c0_i32_0 = arith.constant 0 : i32
    %c0_i32_1 = arith.constant 0 : i32
    return %c0_i32, %c0_i32_0 : i32, i32
  }
  func.func @transform_5(%arg0: i32) -> (i32, i32) {
    %c0_i32 = arith.constant 0 : i32
    %c0_i32_0 = arith.constant 0 : i32
    return %arg0, %c0_i32 : i32, i32
  }
}

</mosaic_0001>

<llo_original>
// kernel: gate_retention_forward.1
$region0: #{gate_retention_forward.1}
  #allocation0 [shape = 'u32[]', space=smem, size = 0x4, offset = 0x4, fixed_abs, tag = 'smem constant byte address 0x4 - core index']
  #allocation1 [shape = 'u32[72,128]{1,0:T(1,128)}', space=vmem, size = 0x9000, scoped, tag = 'internal scratch']
  #allocation2 [shape = 'f32[32,128]{1,0:T(8,128)}', space=vmem, size = 0x4000, scoped, tag = 'scratch operand']
  #allocation3 [shape = 'f32[32,4]{1,0:T(8,128)}', space=vmem, size = 0x4000, scoped, tag = 'scratch operand']
  #allocation4 [shape = 'f32[32,32]{1,0:T(8,128)}', space=vmem, size = 0x4000, scoped, tag = 'scratch operand']
  %s0 = inlined_call_operand.hbm [shape: f32[64,32], index: 0, kind: input, shape index: {}]
  %s1 = inlined_call_operand.hbm [shape: f32[64,32], index: 1, kind: input, shape index: {}]
  %s2 = inlined_call_operand.vmem [shape: bf16[32,128], index: 2, kind: input, shape index: {}]
  %s3 = inlined_call_operand.vmem [shape: bf16[32,4], index: 3, kind: input, shape index: {}]
  %s4 = inlined_call_operand.hbm [shape: bf16[32,32], index: 4, kind: input, shape index: {}]
  %s5 = inlined_call_operand.hbm [shape: f32[64,32], index: 5, kind: output, shape index: {}]
  %s6 = sld [smem:[#allocation0]]
  $region72: #{gate_retention_forward.1} parent=0
    _
  %s8 = ssub.s32 1, %s6
  %s9 = scalar_select 0, %s8, %s6
  $region1: #{gate_retention_forward.1} parent=0
    #allocation5 [shape = 'u8[32768]{0}', space=vmem, size = 0x8000, scoped, tag = 'input window, operand 0']
    #allocation6 [shape = 's32[2]{0}', space=sflag, size = 0x8, scoped, tag = 'scoped memory for gate_retention_forward.1']
    #allocation7 [shape = 's32[2]{0}', space=sflag, size = 0x8, scoped, tag = 'scoped memory for gate_retention_forward.1']
    #allocation8 [shape = 'u8[32768]{0}', space=vmem, size = 0x8000, scoped, tag = 'input window, operand 1']
    #allocation9 [shape = 's32[2]{0}', space=sflag, size = 0x8, scoped, tag = 'scoped memory for gate_retention_forward.1']
    #allocation10 [shape = 'u8[8192]{0}', space=vmem, size = 0x2000, scoped, tag = 'input window, operand 4, single buffered']
    #allocation11 [shape = 'u8[32768]{0}', space=vmem, size = 0x8000, scoped, tag = 'output window, operand 0']
    %10 = vsyncpa [#allocation6], 0
    %s11 = scalar_lea.sflag [#allocation6], 1
    %12 = vsyncpa %s11, 0
    %13 = vsyncpa [#allocation9], 0
    %s14 = scalar_lea.sflag [#allocation9], 1
    %15 = vsyncpa %s14, 0
    %16 = vsyncpa [#allocation7], 0
    %s17 = scalar_lea.sflag [#allocation7], 1
    %18 = vsyncpa %s17, 0
    loop: start=0, step=1, limit=4
    $region2: #{gate_retention_forward.1} parent=1 // loop_pre_header
      _
    $region3: #{gate_retention_forward.1} parent=1 // loop_header
      %s20 = sphi 0, %s24
      %p21 = scmp.ge.s32.totalorder %s20, 4
      %s30 = sphi 0, %s32
      %s33 = sphi 0, %s30
      %s34 = sphi 0, %s33
      %s50 = sphi 0, %s34
      %s56 = sphi 0, %s58
      %s59 = sphi 0, %s56
      %s60 = sphi 0, %s59
      %s76 = sphi 0, %s60
      %s80 = sphi 0, %s80
      %s82 = sphi 0, %s80
      %s83 = sphi 0, %s82
      %s97 = sphi 0, %s83
      %s101 = sphi 0, %s101
      %s103 = sphi 0, %s101
      %s104 = sphi 0, %s103
      %s118 = sphi 0, %s104
      %s122 = sphi 0, %s122
      %s124 = sphi 0, %s122
      %s125 = sphi 0, %s124
      %s139 = sphi 0, %s125
      %s145 = sphi 0, %s147
      %s148 = sphi 0, %s145
      %s149 = sphi 0, %s148
      %s165 = sphi 0, %s149
    $region4: #{gate_retention_forward.1} parent=1 // loop_header_branch
      %23 = sbr.rel (%p21) target = $region8
    $region5: #{gate_retention_forward.1} parent=1 // loop_body
      %s25 = ssub.s32 %s20, 1
      %s26 = ssub.s32 %s20, 2
      %s27 = sadd.s32 %s20, 1
      %s28 = ssub.s32 %s20, %s27
      %p29 = scmp.eq.s32.totalorder %s28, 0
      %s31 = sadd.s32 %s30, 1
      %s32 = scalar_select %p29, %s30, %s31
      %p35 = pneg %p29
      %p36 = scmp.eq.s32.totalorder %s20, 1
      %p37 = por %p35, %p36
      %p38 = scmp.ne.s32.totalorder %s30, %s33
      %p39 = scmp.eq.s32.totalorder %s20, 0
      %p40 = por %p38, %p39
      %p41 = scmp.ne.s32.totalorder %s30, %s33
      %p42 = scmp.eq.s32.totalorder %s25, 1
      %p43 = por %p41, %p42
      %p44 = scmp.ne.s32.totalorder %s33, %s34
      %p45 = scmp.eq.s32.totalorder %s25, 0
      %p46 = por %p44, %p45
      %p47 = scmp.ne.s32.totalorder %s33, %s34
      %p48 = scmp.eq.s32.totalorder %s26, 1
      %p49 = por %p47, %p48
      %p51 = scmp.ne.s32.totalorder %s34, %s50
      %p52 = scmp.eq.s32.totalorder %s26, 0
      %p53 = por %p51, %p52
      %s54 = ssub.s32 %s20, %s27
      %p55 = scmp.eq.s32.totalorder %s54, 0
      %s57 = sadd.s32 %s56, 1
      %s58 = scalar_select %p55, %s56, %s57
      %p61 = pneg %p55
      %p62 = scmp.eq.s32.totalorder %s20, 1
      %p63 = por %p61, %p62
      %p64 = scmp.ne.s32.totalorder %s56, %s59
      %p65 = scmp.eq.s32.totalorder %s20, 0
      %p66 = por %p64, %p65
      %p67 = scmp.ne.s32.totalorder %s56, %s59
      %p68 = scmp.eq.s32.totalorder %s25, 1
      %p69 = por %p67, %p68
      %p70 = scmp.ne.s32.totalorder %s59, %s60
      %p71 = scmp.eq.s32.totalorder %s25, 0
      %p72 = por %p70, %p71
      %p73 = scmp.ne.s32.totalorder %s59, %s60
      %p74 = scmp.eq.s32.totalorder %s26, 1
      %p75 = por %p73, %p74
      %p77 = scmp.ne.s32.totalorder %s60, %s76
      %p78 = scmp.eq.s32.totalorder %s26, 0
      %p79 = por %p77, %p78
      %s81 = sadd.s32 %s80, 1
      %p84 = scmp.eq.s32.totalorder %s20, 1
      %p85 = scmp.ne.s32.totalorder %s80, %s82
      %p86 = scmp.eq.s32.totalorder %s20, 0
      %p87 = por %p85, %p86
      %p88 = scmp.ne.s32.totalorder %s80, %s82
      %p89 = scmp.eq.s32.totalorder %s25, 1
      %p90 = por %p88, %p89
      %p91 = scmp.ne.s32.totalorder %s82, %s83
      %p92 = scmp.eq.s32.totalorder %s25, 0
      %p93 = por %p91, %p92
      %p94 = scmp.ne.s32.totalorder %s82, %s83
      %p95 = scmp.eq.s32.totalorder %s26, 1
      %p96 = por %p94, %p95
      %p98 = scmp.ne.s32.totalorder %s83, %s97
      %p99 = scmp.eq.s32.totalorder %s26, 0
      %p100 = por %p98, %p99
      %s102 = sadd.s32 %s101, 1
      %p105 = scmp.eq.s32.totalorder %s20, 1
      %p106 = scmp.ne.s32.totalorder %s101, %s103
      %p107 = scmp.eq.s32.totalorder %s20, 0
      %p108 = por %p106, %p107
      %p109 = scmp.ne.s32.totalorder %s101, %s103
      %p110 = scmp.eq.s32.totalorder %s25, 1
      %p111 = por %p109, %p110
      %p112 = scmp.ne.s32.totalorder %s103, %s104
      %p113 = scmp.eq.s32.totalorder %s25, 0
      %p114 = por %p112, %p113
      %p115 = scmp.ne.s32.totalorder %s103, %s104
      %p116 = scmp.eq.s32.totalorder %s26, 1
      %p117 = por %p115, %p116
      %p119 = scmp.ne.s32.totalorder %s104, %s118
      %p120 = scmp.eq.s32.totalorder %s26, 0
      %p121 = por %p119, %p120
      %s123 = sadd.s32 %s122, 1
      %p126 = scmp.eq.s32.totalorder %s20, 1
      %p127 = scmp.ne.s32.totalorder %s122, %s124
      %p128 = scmp.eq.s32.totalorder %s20, 0
      %p129 = por %p127, %p128
      %p130 = scmp.ne.s32.totalorder %s122, %s124
      %p131 = scmp.eq.s32.totalorder %s25, 1
      %p132 = por %p130, %p131
      %p133 = scmp.ne.s32.totalorder %s124, %s125
      %p134 = scmp.eq.s32.totalorder %s25, 0
      %p135 = por %p133, %p134
      %p136 = scmp.ne.s32.totalorder %s124, %s125
      %p137 = scmp.eq.s32.totalorder %s26, 1
      %p138 = por %p136, %p137
      %p140 = scmp.ne.s32.totalorder %s125, %s139
      %p141 = scmp.eq.s32.totalorder %s26, 0
      %p142 = por %p140, %p141
      %s143 = ssub.s32 %s20, %s27
      %p144 = scmp.eq.s32.totalorder %s143, 0
      %s146 = sadd.s32 %s145, 1
      %s147 = scalar_select %p144, %s145, %s146
      %p150 = pneg %p144
      %p151 = scmp.eq.s32.totalorder %s20, 1
      %p152 = por %p150, %p151
      %p153 = scmp.ne.s32.totalorder %s145, %s148
      %p154 = scmp.eq.s32.totalorder %s20, 0
      %p155 = por %p153, %p154
      %p156 = scmp.ne.s32.totalorder %s145, %s148
      %p157 = scmp.eq.s32.totalorder %s25, 1
      %p158 = por %p156, %p157
      %p159 = scmp.ne.s32.totalorder %s148, %s149
      %p160 = scmp.eq.s32.totalorder %s25, 0
      %p161 = por %p159, %p160
      %p162 = scmp.ne.s32.totalorder %s148, %s149
      %p163 = scmp.eq.s32.totalorder %s26, 1
      %p164 = por %p162, %p163
      %p166 = scmp.ne.s32.totalorder %s149, %s165
      %p167 = scmp.eq.s32.totalorder %s26, 0
      %p168 = por %p166, %p167
      %p169 = scmp.le.s32.totalorder 1, %s20
      %p170 = scmp.lt.s32.totalorder %s20, 3
      %p171 = pnand %p169, %p170
      %p172 = pneg %p171
      // Predicated region
      $region9: #{gate_retention_forward.1} parent=5 // pred_check
        _
      $region10: #{gate_retention_forward.1} parent=5 // pred_check_branch
        %174 = sbr.rel (%p171) target = $region12
      $region11: #{gate_retention_forward.1} parent=5 // pred_region
        %s175 = ssub.s32 %s20, 1
        // Predicated region
        $region13: #{gate_retention_forward.1} parent=11 // pred_check
          %p176 = pneg %p93
        $region14: #{gate_retention_forward.1} parent=11 // pred_check_branch
          %178 = sbr.rel (%p176) target = $region16
        $region15: #{gate_retention_forward.1} parent=11 // pred_region
          _
        $region16: #{gate_retention_forward.1} parent=11 // pred_fallthru
          _
        // Predicated region
        $region17: #{gate_retention_forward.1} parent=11 // pred_check
          %p179 = pneg %p114
        $region18: #{gate_retention_forward.1} parent=11 // pred_check_branch
          %181 = sbr.rel (%p179) target = $region20
        $region19: #{gate_retention_forward.1} parent=11 // pred_region
          _
        $region20: #{gate_retention_forward.1} parent=11 // pred_fallthru
          _
        // Predicated region
        $region21: #{gate_retention_forward.1} parent=11 // pred_check
          %p182 = pneg %p135
        $region22: #{gate_retention_forward.1} parent=11 // pred_check_branch
          %184 = sbr.rel (%p182) target = $region24
        $region23: #{gate_retention_forward.1} parent=11 // pred_region
          %186 = vsyncadd [#allocation9], 0
          %s187 = sshll.u32 %s4, 4
          %s188 = int_to_ptr.hbm [resolvable:$true] %s187
          %s189 = sshll.u32 [#allocation10], 4
          %s190 = int_to_ptr.vmem [resolvable:$true] %s189
          %195 = dma.hbm_to_vmem [thread:$0]  %s188, 256, %s190, [#allocation9], 64, 64, 4
        $region24: #{gate_retention_forward.1} parent=11 // pred_fallthru
          _
      $region12: #{gate_retention_forward.1} parent=5 // pred_fallthru
        _
      %p196 = scmp.lt.s32.totalorder %s20, 2
      // Predicated region
      $region25: #{gate_retention_forward.1} parent=5 // pred_check
        %p197 = pneg %p196
      $region26: #{gate_retention_forward.1} parent=5 // pred_check_branch
        %199 = sbr.rel (%p197) target = $region28
      $region27: #{gate_retention_forward.1} parent=5 // pred_region
        // Predicated region
        $region29: #{gate_retention_forward.1} parent=27 // pred_check
          %p200 = pneg %p40
        $region30: #{gate_retention_forward.1} parent=27 // pred_check_branch
          %202 = sbr.rel (%p200) target = $region32
        $region31: #{gate_retention_forward.1} parent=27 // pred_region
          %s203 = sand.u32 %s30, 1
          %s204 = scalar_lea.sflag [#allocation6], %s203
          %s205 = sand.u32 %s30, 1
          %s206 = smul.addr %s205, 32
          %s207 = scalar_lea.vmem [#allocation5], %s206
          %s208 = smul.u32 4, %s20
          %210 = vsyncadd %s204, 0
          %s211 = smul.addr %s208, 8
          %s212 = scalar_lea.hbm %s0, %s211
          %s213 = sshll.u32 %s212, 4
          %s214 = int_to_ptr.hbm [resolvable:$true] %s213
          %s215 = sshll.u32 %s207, 4
          %s216 = int_to_ptr.vmem [resolvable:$true] %s215
          %221 = dma.hbm_to_vmem [thread:$0]  %s214, 512, %s216, %s204, 128, 128, 8
        $region32: #{gate_retention_forward.1} parent=27 // pred_fallthru
          _
        // Predicated region
        $region33: #{gate_retention_forward.1} parent=27 // pred_check
          %p222 = pneg %p66
        $region34: #{gate_retention_forward.1} parent=27 // pred_check_branch
          %224 = sbr.rel (%p222) target = $region36
        $region35: #{gate_retention_forward.1} parent=27 // pred_region
          %s225 = sand.u32 %s20, 1
          %s226 = scalar_lea.sflag [#allocation9], %s225
          %s227 = sand.u32 %s56, 1
          %s228 = smul.addr %s227, 32
          %s229 = scalar_lea.vmem [#allocation8], %s228
          %s230 = smul.u32 4, %s20
          %232 = vsyncadd %s226, 0
          %s233 = smul.addr %s230, 8
          %s234 = scalar_lea.hbm %s1, %s233
          %s235 = sshll.u32 %s234, 4
          %s236 = int_to_ptr.hbm [resolvable:$true] %s235
          %s237 = sshll.u32 %s229, 4
          %s238 = int_to_ptr.vmem [resolvable:$true] %s237
          %243 = dma.hbm_to_vmem [thread:$0]  %s236, 512, %s238, %s226, 128, 128, 8
        $region36: #{gate_retention_forward.1} parent=27 // pred_fallthru
          _
      $region28: #{gate_retention_forward.1} parent=5 // pred_fallthru
        _
      %p244 = scmp.le.s32.totalorder 1, %s20
      %p245 = scmp.lt.s32.totalorder %s20, 3
      %p246 = pnand %p244, %p245
      %p247 = pneg %p246
      // Predicated region
      $region37: #{gate_retention_forward.1} parent=5 // pred_check
        _
      $region38: #{gate_retention_forward.1} parent=5 // pred_check_branch
        %249 = sbr.rel (%p246) target = $region40
      $region39: #{gate_retention_forward.1} parent=5 // pred_region
        %s250 = ssub.s32 %s20, 1
        %s251 = sand.u32 %s33, 1
        %s252 = scalar_lea.sflag [#allocation6], %s251
        %s253 = sand.u32 %s33, 1
        %s254 = smul.addr %s253, 32
        %s255 = scalar_lea.vmem [#allocation5], %s254
        // Predicated region
        $region41: #{gate_retention_forward.1} parent=39 // pred_check
          %p256 = pneg %p46
        $region42: #{gate_retention_forward.1} parent=39 // pred_check_branch
          %258 = sbr.rel (%p256) target = $region44
        $region43: #{gate_retention_forward.1} parent=39 // pred_region
          %260 = dma.done %s252, 512
        $region44: #{gate_retention_forward.1} parent=39 // pred_fallthru
          _
        %s261 = sand.u32 %s25, 1
        %s262 = scalar_lea.sflag [#allocation9], %s261
        %s263 = sand.u32 %s59, 1
        %s264 = smul.addr %s263, 32
        %s265 = scalar_lea.vmem [#allocation8], %s264
        // Predicated region
        $region45: #{gate_retention_forward.1} parent=39 // pred_check
          %p266 = pneg %p72
        $region46: #{gate_retention_forward.1} parent=39 // pred_check_branch
          %268 = sbr.rel (%p266) target = $region48
        $region47: #{gate_retention_forward.1} parent=39 // pred_region
          %270 = dma.done %s262, 512
        $region48: #{gate_retention_forward.1} parent=39 // pred_fallthru
          _
        // Predicated region
        $region49: #{gate_retention_forward.1} parent=39 // pred_check
          %p271 = pneg %p135
        $region50: #{gate_retention_forward.1} parent=39 // pred_check_branch
          %273 = sbr.rel (%p271) target = $region52
        $region51: #{gate_retention_forward.1} parent=39 // pred_region
          %275 = dma.done [#allocation9], 256
        $region52: #{gate_retention_forward.1} parent=39 // pred_fallthru
          _
        %s276 = sand.u32 %s33, 1
        %s277 = scalar_lea.sflag [#allocation6], %s276
        %s278 = sand.u32 %s33, 1
        %s279 = smul.addr %s278, 32
        %s280 = scalar_lea.vmem [#allocation5], %s279
        %p281 = pneg %p46
        %p282 = pneg %p43
        %s283 = sand.u32 %s25, 1
        %s284 = scalar_lea.sflag [#allocation9], %s283
        %s285 = sand.u32 %s59, 1
        %s286 = smul.addr %s285, 32
        %s287 = scalar_lea.vmem [#allocation8], %s286
        %p288 = pneg %p72
        %p289 = pneg %p69
        %p290 = pneg %p93
        %p291 = pneg %p90
        %p292 = pneg %p114
        %p293 = pneg %p111
        %p294 = pneg %p135
        %p295 = pneg %p132
        %p296 = pneg %p161
        %p297 = pneg %p158
        %s298 = sand.u32 %s148, 1
        %s299 = scalar_lea.sflag [#allocation7], %s298
        %s300 = sand.u32 %s148, 1
        %s301 = smul.addr %s300, 32
        %s302 = scalar_lea.vmem [#allocation11], %s301
        %s303 = smul.u32 4, %s25
        %s304 = smul.u32 4, %s25
        %s305 = smul.u32 4, %s25
        %v307 = vld [vmem:[%s255] sm:$0xff]
        %v308 = vld [vmem:[%s255 + $0x8] sm:$0xff]
        %v309 = vld [vmem:[%s255 + $0x10] sm:$0xff]
        %v310 = vld [vmem:[%s255 + $0x18] sm:$0xff]
        %v311 = vld [vmem:[%s265] sm:$0xff]
        %v312 = vld [vmem:[%s265 + $0x8] sm:$0xff]
        %v313 = vld [vmem:[%s265 + $0x10] sm:$0xff]
        %v314 = vld [vmem:[%s265 + $0x18] sm:$0xff]
        %v315 = vadd.f32 %v307, %v311
        %v316 = vadd.f32 %v308, %v312
        %v317 = vadd.f32 %v309, %v313
        %v318 = vadd.f32 %v310, %v314
        %v319 = vpack.c.bf16 %v308, %v307
        %v320 = vpack.c.bf16 %v310, %v309
        %v321 = vld [vmem:[%s2] sm:$0xf]
        %v322 = vld [vmem:[%s2 + $0x4] sm:$0xf]
        %v323 = vld [vmem:[%s2 + $0x8] sm:$0xf]
        %v324 = vld [vmem:[%s2 + $0xc] sm:$0xf]
        %v329 = vunpack.c.l.b16 %v321
        %v330 = vunpack.c.l.b16 %v322
        %v331 = vunpack.c.l.b16 %v323
        %v332 = vunpack.c.l.b16 %v324
        %v333 = vpack.c.b16 %v330, %v329
        %v334 = vpack.c.b16 %v332, %v331
        %vm337 = vcmask 261120
        %v339 = vsel %vm337, %v319, 0
        %v342 = vsel %vm337, %v320, 0
        %344 = vmatpush.bf16.msra.mxu0 0
        %345 = vmatpush.bf16.msra.mxu0 0
        %346 = vmatpush.bf16.msra.mxu0 0
        %347 = vmatpush.bf16.msra.mxu0 0
        %348 = vmatpush.bf16.msra.mxu0 0
        %349 = vmatpush.bf16.msra.mxu0 0
        %350 = vmatpush.bf16.msra.mxu0 %v334
        %351 = vmatpush.bf16.msra.mxu0 %v333
        %352 = vmatmul.bf16.gmra.mxu0 %v339
        %v353 = vpop.f32.mrf.mxu0
        %v354 = vadd.f32 0.0, %v353
        %v355 = vpop.f32.mrf.mxu0
        %v356 = vadd.f32 0.0, %v355
        %357 = vmatmul.bf16.gmra.mxu0 %v342
        %v358 = vpop.f32.mrf.mxu0
        %v359 = vadd.f32 0.0, %v358
        %v360 = vpop.f32.mrf.mxu0
        %v361 = vadd.f32 0.0, %v360
        %362 = vdwg.mxu0
        %v363 = vmul.f32 %v354, %v354
        %v364 = vmul.f32 %v356, %v356
        %v365 = vmul.f32 %v359, %v359
        %v366 = vmul.f32 %v361, %v361
        %v367 = vsel %vm337, %v363, 0.0
        %368 = vadd.xlane.f32.xlu0 %v367
        %v369 = vpop.xlane.xlu0 %368
        %v370 = vsel %vm337, %v364, 0.0
        %371 = vadd.xlane.f32.xlu0 %v370
        %v372 = vpop.xlane.xlu0 %371
        %v373 = vsel %vm337, %v365, 0.0
        %374 = vadd.xlane.f32.xlu0 %v373
        %v375 = vpop.xlane.xlu0 %374
        %v376 = vsel %vm337, %v366, 0.0
        %377 = vadd.xlane.f32.xlu0 %v376
        %v378 = vpop.xlane.xlu0 %377
        %v379 = vrcp.pop 32.0
        %v380 = vmul.f32 32.0, %v379
        %v381 = vsub.f32 1.0, %v380
        %v382 = vmul.f32 %v379, %v381
        %v383 = vadd.f32 %v379, %v382
        %vm384 = vweird.f32 %v379
        %v385 = vsel %vm384, %v379, %v383
        %v386 = vmul.f32 %v369, %v385
        %v387 = vmul.f32 %v372, %v385
        %v388 = vmul.f32 %v375, %v385
        %v389 = vmul.f32 %v378, %v385
        %v390 = vadd.f32 %v386, 1e-06
        %v391 = vadd.f32 %v387, 1e-06
        %v392 = vadd.f32 %v388, 1e-06
        %v393 = vadd.f32 %v389, 1e-06
        %v394 = vrsqrt.pop %v390
        %v395 = vmul.f32 %v394, %v390
        %v396 = vmul.f32 %v395, %v394
        %v397 = vmul.f32 0.5, %v396
        %v398 = vsub.f32 1.5, %v397
        %v399 = vmul.f32 %v394, %v398
        %vm400 = vweird.f32 %v390
        %vm401 = vweird.f32 %v394
        %vm402 = vmor %vm400, %vm401
        %v403 = vsel %vm402, %v394, %v399
        %v404 = vrsqrt.pop %v391
        %v405 = vmul.f32 %v404, %v391
        %v406 = vmul.f32 %v405, %v404
        %v407 = vmul.f32 0.5, %v406
        %v408 = vsub.f32 1.5, %v407
        %v409 = vmul.f32 %v404, %v408
        %vm410 = vweird.f32 %v391
        %vm411 = vweird.f32 %v404
        %vm412 = vmor %vm410, %vm411
        %v413 = vsel %vm412, %v404, %v409
        %v414 = vrsqrt.pop %v392
        %v415 = vmul.f32 %v414, %v392
        %v416 = vmul.f32 %v415, %v414
        %v417 = vmul.f32 0.5, %v416
        %v418 = vsub.f32 1.5, %v417
        %v419 = vmul.f32 %v414, %v418
        %vm420 = vweird.f32 %v392
        %vm421 = vweird.f32 %v414
        %vm422 = vmor %vm420, %vm421
        %v423 = vsel %vm422, %v414, %v419
        %v424 = vrsqrt.pop %v393
        %v425 = vmul.f32 %v424, %v393
        %v426 = vmul.f32 %v425, %v424
        %v427 = vmul.f32 0.5, %v426
        %v428 = vsub.f32 1.5, %v427
        %v429 = vmul.f32 %v424, %v428
        %vm430 = vweird.f32 %v393
        %vm431 = vweird.f32 %v424
        %vm432 = vmor %vm430, %vm431
        %v433 = vsel %vm432, %v424, %v429
        %v434 = vmul.f32 %v354, %v403
        %v435 = vmul.f32 %v356, %v413
        %v436 = vmul.f32 %v359, %v423
        %v437 = vmul.f32 %v361, %v433
        %v438 = vmul.f32 %v434, 0.35355338
        %v439 = vmul.f32 %v435, 0.35355338
        %v440 = vmul.f32 %v436, 0.35355338
        %v441 = vmul.f32 %v437, 0.35355338
        %442 = vst.msk [vmem:[#allocation2] sm:$0xff] %vm337, %v438
        %443 = vst.msk [vmem:[#allocation2 + $0x8] sm:$0xff] %vm337, %v439
        %444 = vst.msk [vmem:[#allocation2 + $0x10] sm:$0xff] %vm337, %v440
        %445 = vst.msk [vmem:[#allocation2 + $0x18] sm:$0xff] %vm337, %v441
        %450 = vrot.lane.b32.xlu0 %v363, 96
        %v451 = vpop.permute.xlu0 %450
        %452 = vrot.lane.b32.xlu0 %v364, 96
        %v453 = vpop.permute.xlu0 %452
        %454 = vrot.lane.b32.xlu0 %v365, 96
        %v455 = vpop.permute.xlu0 %454
        %456 = vrot.lane.b32.xlu0 %v366, 96
        %v457 = vpop.permute.xlu0 %456
        %v462 = vsel %vm337, %v451, 0.0
        %463 = vadd.xlane.f32.xlu0 %v462
        %v464 = vpop.xlane.xlu0 %463
        %v465 = vsel %vm337, %v453, 0.0
        %466 = vadd.xlane.f32.xlu0 %v465
        %v467 = vpop.xlane.xlu0 %466
        %v468 = vsel %vm337, %v455, 0.0
        %469 = vadd.xlane.f32.xlu0 %v468
        %v470 = vpop.xlane.xlu0 %469
        %v471 = vsel %vm337, %v457, 0.0
        %472 = vadd.xlane.f32.xlu0 %v471
        %v473 = vpop.xlane.xlu0 %472
        %v474 = vmul.f32 %v464, %v385
        %v475 = vmul.f32 %v467, %v385
        %v476 = vmul.f32 %v470, %v385
        %v477 = vmul.f32 %v473, %v385
        %v478 = vadd.f32 %v474, 1e-06
        %v479 = vadd.f32 %v475, 1e-06
        %v480 = vadd.f32 %v476, 1e-06
        %v481 = vadd.f32 %v477, 1e-06
        %v482 = vrsqrt.pop %v478
        %v483 = vmul.f32 %v482, %v478
        %v484 = vmul.f32 %v483, %v482
        %v485 = vmul.f32 0.5, %v484
        %v486 = vsub.f32 1.5, %v485
        %v487 = vmul.f32 %v482, %v486
        %vm488 = vweird.f32 %v478
        %vm489 = vweird.f32 %v482
        %vm490 = vmor %vm488, %vm489
        %v491 = vsel %vm490, %v482, %v487
        %v492 = vrsqrt.pop %v479
        %v493 = vmul.f32 %v492, %v479
        %v494 = vmul.f32 %v493, %v492
        %v495 = vmul.f32 0.5, %v494
        %v496 = vsub.f32 1.5, %v495
        %v497 = vmul.f32 %v492, %v496
        %vm498 = vweird.f32 %v479
        %vm499 = vweird.f32 %v492
        %vm500 = vmor %vm498, %vm499
        %v501 = vsel %vm500, %v492, %v497
        %v502 = vrsqrt.pop %v480
        %v503 = vmul.f32 %v502, %v480
        %v504 = vmul.f32 %v503, %v502
        %v505 = vmul.f32 0.5, %v504
        %v506 = vsub.f32 1.5, %v505
        %v507 = vmul.f32 %v502, %v506
        %vm508 = vweird.f32 %v480
        %vm509 = vweird.f32 %v502
        %vm510 = vmor %vm508, %vm509
        %v511 = vsel %vm510, %v502, %v507
        %v512 = vrsqrt.pop %v481
        %v513 = vmul.f32 %v512, %v481
        %v514 = vmul.f32 %v513, %v512
        %v515 = vmul.f32 0.5, %v514
        %v516 = vsub.f32 1.5, %v515
        %v517 = vmul.f32 %v512, %v516
        %vm518 = vweird.f32 %v481
        %vm519 = vweird.f32 %v512
        %vm520 = vmor %vm518, %vm519
        %v521 = vsel %vm520, %v512, %v517
        %v522 = vmul.f32 %v354, %v491
        %v523 = vmul.f32 %v356, %v501
        %v524 = vmul.f32 %v359, %v511
        %v525 = vmul.f32 %v361, %v521
        %vm526 = vcmask 523520
        %527 = vst.msk [vmem:[#allocation2] sm:$0xff] %vm526, %v522
        %528 = vst.msk [vmem:[#allocation2 + $0x8] sm:$0xff] %vm526, %v523
        %529 = vst.msk [vmem:[#allocation2 + $0x10] sm:$0xff] %vm526, %v524
        %530 = vst.msk [vmem:[#allocation2 + $0x18] sm:$0xff] %vm526, %v525
        %531 = vrot.lane.b32.xlu0 %v363, 64
        %v532 = vpop.permute.xlu0 %531
        %533 = vrot.lane.b32.xlu0 %v364, 64
        %v534 = vpop.permute.xlu0 %533
        %535 = vrot.lane.b32.xlu0 %v365, 64
        %v536 = vpop.permute.xlu0 %535
        %537 = vrot.lane.b32.xlu0 %v366, 64
        %v538 = vpop.permute.xlu0 %537
        %v543 = vsel %vm337, %v532, 0.0
        %544 = vadd.xlane.f32.xlu0 %v543
        %v545 = vpop.xlane.xlu0 %544
        %v546 = vsel %vm337, %v534, 0.0
        %547 = vadd.xlane.f32.xlu0 %v546
        %v548 = vpop.xlane.xlu0 %547
        %v549 = vsel %vm337, %v536, 0.0
        %550 = vadd.xlane.f32.xlu0 %v549
        %v551 = vpop.xlane.xlu0 %550
        %v552 = vsel %vm337, %v538, 0.0
        %553 = vadd.xlane.f32.xlu0 %v552
        %v554 = vpop.xlane.xlu0 %553
        %v555 = vmul.f32 %v545, %v385
        %v556 = vmul.f32 %v548, %v385
        %v557 = vmul.f32 %v551, %v385
        %v558 = vmul.f32 %v554, %v385
        %v559 = vadd.f32 %v555, 1e-06
        %v560 = vadd.f32 %v556, 1e-06
        %v561 = vadd.f32 %v557, 1e-06
        %v562 = vadd.f32 %v558, 1e-06
        %v563 = vrsqrt.pop %v559
        %v564 = vmul.f32 %v563, %v559
        %v565 = vmul.f32 %v564, %v563
        %v566 = vmul.f32 0.5, %v565
        %v567 = vsub.f32 1.5, %v566
        %v568 = vmul.f32 %v563, %v567
        %vm569 = vweird.f32 %v559
        %vm570 = vweird.f32 %v563
        %vm571 = vmor %vm569, %vm570
        %v572 = vsel %vm571, %v563, %v568
        %v573 = vrsqrt.pop %v560
        %v574 = vmul.f32 %v573, %v560
        %v575 = vmul.f32 %v574, %v573
        %v576 = vmul.f32 0.5, %v575
        %v577 = vsub.f32 1.5, %v576
        %v578 = vmul.f32 %v573, %v577
        %vm579 = vweird.f32 %v560
        %vm580 = vweird.f32 %v573
        %vm581 = vmor %vm579, %vm580
        %v582 = vsel %vm581, %v573, %v578
        %v583 = vrsqrt.pop %v561
        %v584 = vmul.f32 %v583, %v561
        %v585 = vmul.f32 %v584, %v583
        %v586 = vmul.f32 0.5, %v585
        %v587 = vsub.f32 1.5, %v586
        %v588 = vmul.f32 %v583, %v587
        %vm589 = vweird.f32 %v561
        %vm590 = vweird.f32 %v583
        %vm591 = vmor %vm589, %vm590
        %v592 = vsel %vm591, %v583, %v588
        %v593 = vrsqrt.pop %v562
        %v594 = vmul.f32 %v593, %v562
        %v595 = vmul.f32 %v594, %v593
        %v596 = vmul.f32 0.5, %v595
        %v597 = vsub.f32 1.5, %v596
        %v598 = vmul.f32 %v593, %v597
        %vm599 = vweird.f32 %v562
        %vm600 = vweird.f32 %v593
        %vm601 = vmor %vm599, %vm600
        %v602 = vsel %vm601, %v593, %v598
        %v603 = vmul.f32 %v354, %v572
        %v604 = vmul.f32 %v356, %v582
        %v605 = vmul.f32 %v359, %v592
        %v606 = vmul.f32 %v361, %v602
        %vm607 = vcmask 785920
        %608 = vst.msk [vmem:[#allocation2] sm:$0xff] %vm607, %v603
        %609 = vst.msk [vmem:[#allocation2 + $0x8] sm:$0xff] %vm607, %v604
        %610 = vst.msk [vmem:[#allocation2 + $0x10] sm:$0xff] %vm607, %v605
        %611 = vst.msk [vmem:[#allocation2 + $0x18] sm:$0xff] %vm607, %v606
        %vm612 = vcmask 1048320
        %613 = vst.msk [vmem:[#allocation2] sm:$0xff] %vm612, %v354
        %614 = vst.msk [vmem:[#allocation2 + $0x8] sm:$0xff] %vm612, %v356
        %615 = vst.msk [vmem:[#allocation2 + $0x10] sm:$0xff] %vm612, %v359
        %616 = vst.msk [vmem:[#allocation2 + $0x18] sm:$0xff] %vm612, %v361
        %v617 = vpack.c.bf16 %v316, %v315
        %v618 = vpack.c.bf16 %v318, %v317
        %v619 = vld [vmem:[%s3] sm:$0xf]
        %v620 = vld [vmem:[%s3 + $0x4] sm:$0xf]
        %v621 = vld [vmem:[%s3 + $0x8] sm:$0xf]
        %v622 = vld [vmem:[%s3 + $0xc] sm:$0xf]
        %v627 = vunpack.c.l.b16 %v619
        %v628 = vunpack.c.l.b16 %v620
        %v629 = vunpack.c.l.b16 %v621
        %v630 = vunpack.c.l.b16 %v622
        %v631 = vpack.c.b16 %v628, %v627
        %v632 = vpack.c.b16 %v630, %v629
        %v636 = vsel %vm337, %v617, 0
        %v639 = vsel %vm337, %v618, 0
        %641 = vmatpush.bf16.msra.mxu0 0
        %642 = vmatpush.bf16.msra.mxu0 0
        %643 = vmatpush.bf16.msra.mxu0 0
        %644 = vmatpush.bf16.msra.mxu0 0
        %645 = vmatpush.bf16.msra.mxu0 0
        %646 = vmatpush.bf16.msra.mxu0 0
        %647 = vmatpush.bf16.msra.mxu0 %v632
        %648 = vmatpush.bf16.msra.mxu0 %v631
        %649 = vmatmul.bf16.gmra.mxu0 %v636
        %v650 = vpop.f32.mrf.mxu0
        %v651 = vadd.f32 0.0, %v650
        %v652 = vpop.f32.mrf.mxu0
        %v653 = vadd.f32 0.0, %v652
        %654 = vmatmul.bf16.gmra.mxu0 %v639
        %v655 = vpop.f32.mrf.mxu0
        %v656 = vadd.f32 0.0, %v655
        %v657 = vpop.f32.mrf.mxu0
        %v658 = vadd.f32 0.0, %v657
        %659 = vdwg.mxu0
        %v660 = vmin.f32 %v651, 0.0
        %v661 = vmin.f32 %v653, 0.0
        %v662 = vmin.f32 %v656, 0.0
        %v663 = vmin.f32 %v658, 0.0
        %v664 = vand.u32 2147483647, %v651
        %v665 = vand.u32 2147483647, %v653
        %v666 = vand.u32 2147483647, %v656
        %v667 = vand.u32 2147483647, %v658
        %v668 = vsub.f32 0.0, %v664
        %v669 = vsub.f32 0.0, %v665
        %v670 = vsub.f32 0.0, %v666
        %v671 = vsub.f32 0.0, %v667
        %v672 = vmul.f32 %v668, 1.442695
        %v673 = vpow.pop %v672
        %v674 = vmul.f32 %v669, 1.442695
        %v675 = vpow.pop %v674
        %v676 = vmul.f32 %v670, 1.442695
        %v677 = vpow.pop %v676
        %v678 = vmul.f32 %v671, 1.442695
        %v679 = vpow.pop %v678
        %v680 = vadd.f32 %v673, 1.0
        %v681 = vadd.f32 %v675, 1.0
        %v682 = vadd.f32 %v677, 1.0
        %v683 = vadd.f32 %v679, 1.0
        %v684 = vlog2.pop %v680
        %v685 = vmul.f32 %v684, 0.6931472
        %v686 = vlog2.pop %v681
        %v687 = vmul.f32 %v686, 0.6931472
        %v688 = vlog2.pop %v682
        %v689 = vmul.f32 %v688, 0.6931472
        %v690 = vlog2.pop %v683
        %v691 = vmul.f32 %v690, 0.6931472
        %v692 = vsub.f32 %v660, %v685
        %v693 = vsub.f32 %v661, %v687
        %v694 = vsub.f32 %v662, %v689
        %v695 = vsub.f32 %v663, %v691
        %v696 = vrcp.pop 16.0
        %v697 = vmul.f32 16.0, %v696
        %v698 = vsub.f32 1.0, %v697
        %v699 = vmul.f32 %v696, %v698
        %v700 = vadd.f32 %v696, %v699
        %vm701 = vweird.f32 %v696
        %v702 = vsel %vm701, %v696, %v700
        %v703 = vmul.f32 %v692, %v702
        %v704 = vmul.f32 %v693, %v702
        %v705 = vmul.f32 %v694, %v702
        %v706 = vmul.f32 %v695, %v702
        %v707 = vlaneseq
        %v708 = vshrl.u32 %v707, 7
        %v709 = vadd.s32 %v708, 8
        %v710 = vadd.s32 %v708, 16
        %v711 = vadd.s32 %v708, 24
        %vm712 = vcmp.lt.s32.totalorder %v708, 0
        %v713 = vsub.s32 0, %v708
        %v714 = vsel %vm712, %v713, %v708
        %v715 = vshrl.u32 %v714, 4
        %v716 = vand.u32 %v714, 15
        %v717 = vsub.s32 0, %v716
        %v718 = vsel %vm712, %v717, %v716
        %vm719 = vcmp.lt.s32.totalorder %v709, 0
        %v720 = vsub.s32 0, %v709
        %v721 = vsel %vm719, %v720, %v709
        %v722 = vshrl.u32 %v721, 4
        %v723 = vand.u32 %v721, 15
        %v724 = vsub.s32 0, %v723
        %v725 = vsel %vm719, %v724, %v723
        %vm726 = vcmp.lt.s32.totalorder %v710, 0
        %v727 = vsub.s32 0, %v710
        %v728 = vsel %vm726, %v727, %v710
        %v729 = vshrl.u32 %v728, 4
        %v730 = vand.u32 %v728, 15
        %v731 = vsub.s32 0, %v730
        %v732 = vsel %vm726, %v731, %v730
        %vm733 = vcmp.lt.s32.totalorder %v711, 0
        %v734 = vsub.s32 0, %v711
        %v735 = vsel %vm733, %v734, %v711
        %v736 = vshrl.u32 %v735, 4
        %v737 = vand.u32 %v735, 15
        %v738 = vsub.s32 0, %v737
        %v739 = vsel %vm733, %v738, %v737
        %vm740 = vcmp.ne.s32.totalorder %v718, 0
        %vm741 = vcmp.ne.s32.totalorder %v725, 0
        %vm742 = vcmp.ne.s32.totalorder %v732, 0
        %vm743 = vcmp.ne.s32.totalorder %v739, 0
        %vm744 = vcmp.lt.s32.totalorder %v718, 0
        %vm745 = vcmp.lt.s32.totalorder %v725, 0
        %vm746 = vcmp.lt.s32.totalorder %v732, 0
        %vm747 = vcmp.lt.s32.totalorder %v739, 0
        %vm748 = vmand %vm744, %vm740
        %vm749 = vmand %vm745, %vm741
        %vm750 = vmand %vm746, %vm742
        %vm751 = vmand %vm747, %vm743
        %v752 = vadd.s32 %v718, 16
        %v753 = vadd.s32 %v725, 16
        %v754 = vadd.s32 %v732, 16
        %v755 = vadd.s32 %v739, 16
        %v756 = vsel %vm748, %v752, %v718
        %v757 = vsel %vm749, %v753, %v725
        %v758 = vsel %vm750, %v754, %v732
        %v759 = vsel %vm751, %v755, %v739
        %v760 = vrot.slane %v703, 7
        %v761 = vrot.slane %v704, 7
        %v762 = vrot.slane %v705, 7
        %v763 = vrot.slane %v706, 7
        %vm764 = vcmp.lt.s32.totalorder %v708, 1
        %v765 = vsel %vm764, %v762, %v763
        %v766 = vsel %vm764, %v761, %v762
        %v767 = vsel %vm764, %v760, %v761
        %v768 = vsel %vm764, %v763, %v760
        %vm769 = vcmp.ge.s32.totalorder %v756, 1
        %vm770 = vcmp.ge.s32.totalorder %v757, 1
        %vm771 = vcmp.ge.s32.totalorder %v758, 1
        %vm772 = vcmp.ge.s32.totalorder %v759, 1
        %v773 = vsel %vm769, %v768, 0.0
        %v774 = vsel %vm770, %v767, 0.0
        %v775 = vsel %vm771, %v766, 0.0
        %v776 = vsel %vm772, %v765, 0.0
        %v777 = vadd.f32 %v703, %v773
        %v778 = vadd.f32 %v704, %v774
        %v779 = vadd.f32 %v705, %v775
        %v780 = vadd.f32 %v706, %v776
        %v781 = vrot.slane %v777, 6
        %v782 = vrot.slane %v778, 6
        %v783 = vrot.slane %v779, 6
        %v784 = vrot.slane %v780, 6
        %vm785 = vcmp.lt.s32.totalorder %v708, 2
        %v786 = vsel %vm785, %v783, %v784
        %v787 = vsel %vm785, %v782, %v783
        %v788 = vsel %vm785, %v781, %v782
        %v789 = vsel %vm785, %v784, %v781
        %vm790 = vcmp.ge.s32.totalorder %v756, 2
        %vm791 = vcmp.ge.s32.totalorder %v757, 2
        %vm792 = vcmp.ge.s32.totalorder %v758, 2
        %vm793 = vcmp.ge.s32.totalorder %v759, 2
        %v794 = vsel %vm790, %v789, 0.0
        %v795 = vsel %vm791, %v788, 0.0
        %v796 = vsel %vm792, %v787, 0.0
        %v797 = vsel %vm793, %v786, 0.0
        %v798 = vadd.f32 %v777, %v794
        %v799 = vadd.f32 %v778, %v795
        %v800 = vadd.f32 %v779, %v796
        %v801 = vadd.f32 %v780, %v797
        %v802 = vrot.slane %v798, 4
        %v803 = vrot.slane %v799, 4
        %v804 = vrot.slane %v800, 4
        %v805 = vrot.slane %v801, 4
        %vm806 = vcmp.lt.s32.totalorder %v708, 4
        %v807 = vsel %vm806, %v804, %v805
        %v808 = vsel %vm806, %v803, %v804
        %v809 = vsel %vm806, %v802, %v803
        %v810 = vsel %vm806, %v805, %v802
        %vm811 = vcmp.ge.s32.totalorder %v756, 4
        %vm812 = vcmp.ge.s32.totalorder %v757, 4
        %vm813 = vcmp.ge.s32.totalorder %v758, 4
        %vm814 = vcmp.ge.s32.totalorder %v759, 4
        %v815 = vsel %vm811, %v810, 0.0
        %v816 = vsel %vm812, %v809, 0.0
        %v817 = vsel %vm813, %v808, 0.0
        %v818 = vsel %vm814, %v807, 0.0
        %v819 = vadd.f32 %v798, %v815
        %v820 = vadd.f32 %v799, %v816
        %v821 = vadd.f32 %v800, %v817
        %v822 = vadd.f32 %v801, %v818
        %vm823 = vcmp.ge.s32.totalorder %v756, 8
        %vm824 = vcmp.ge.s32.totalorder %v757, 8
        %vm825 = vcmp.ge.s32.totalorder %v758, 8
        %vm826 = vcmp.ge.s32.totalorder %v759, 8
        %v827 = vsel %vm823, %v822, 0.0
        %v828 = vsel %vm824, %v819, 0.0
        %v829 = vsel %vm825, %v820, 0.0
        %v830 = vsel %vm826, %v821, 0.0
        %v831 = vadd.f32 %v819, %v827
        %v832 = vadd.f32 %v820, %v828
        %v833 = vadd.f32 %v821, %v829
        %v834 = vadd.f32 %v822, %v830
        %vm835 = vcmask 31744
        %836 = vst.msk [vmem:[#allocation3] sm:$0xff] %vm835, %v831
        %837 = vst.msk [vmem:[#allocation3 + $0x8] sm:$0xff] %vm835, %v832
        %838 = vst.msk [vmem:[#allocation3 + $0x10] sm:$0xff] %vm835, %v833
        %839 = vst.msk [vmem:[#allocation3 + $0x18] sm:$0xff] %vm835, %v834
        %v840 = vlaneseq
        %v841 = vand.u32 %v840, 127
        %vm842 = vcmp.le.s32.totalorder %v841, %v708
        %vm843 = vcmp.le.s32.totalorder %v841, %v709
        loop: start=0, step=1, limit=2
        $region53: #{gate_retention_forward.1} parent=39 // loop_pre_header
          _
        $region54: #{gate_retention_forward.1} parent=39 // loop_header
          %s845 = sphi 0, %s849
          %p846 = scmp.ge.s32.totalorder %s845, 2
        $region55: #{gate_retention_forward.1} parent=39 // loop_header_branch
          %848 = sbr.rel (%p846) target = $region59
        $region56: #{gate_retention_forward.1} parent=39 // loop_body
          %s850 = smul.u32 %s845, 16
          %s851 = scalar_lea.vmem [#allocation3], %s850
          %v852 = vld [vmem:[%s851] sm:$0xff]
          %v853 = vld [vmem:[%s851 + $0x8] sm:$0xff]
          %854 = vxpose.xlu0.b32.start [1/16] %v852, 128
          %855 = vxpose.xlu0.b32.cont [2/16] %v853, 128
          %856 = vxpose.xlu0.b32.cont [3/16] 0.0, 128
          %857 = vxpose.xlu0.b32.cont [4/16] 0.0, 128
          %858 = vxpose.xlu0.b32.cont [5/16] 0.0, 128
          %859 = vxpose.xlu0.b32.cont [6/16] 0.0, 128
          %860 = vxpose.xlu0.b32.cont [7/16] 0.0, 128
          %861 = vxpose.xlu0.b32.cont [8/16] 0.0, 128
          %862 = vxpose.xlu0.b32.cont [9/16] 0.0, 128
          %863 = vxpose.xlu0.b32.cont [10/16] 0.0, 128
          %864 = vxpose.xlu0.b32.cont [11/16] 0.0, 128
          %865 = vxpose.xlu0.b32.cont [12/16] 0.0, 128
          %866 = vxpose.xlu0.b32.cont [13/16] 0.0, 128
          %867 = vxpose.xlu0.b32.cont [14/16] 0.0, 128
          %868 = vxpose.xlu0.b32.cont [15/16] 0.0, 128
          %869 = vxpose.xlu0.b32.end [16/16] 0.0, 128
          %v870 = vpop.trf.xlu0
          %v871 = vpop.trf.xlu0
          %v872 = vpop.trf.xlu0
          %v873 = vpop.trf.xlu0
          %v874 = vpop.trf.xlu0
          %v875 = vpop.trf.xlu0
          %v876 = vpop.trf.xlu0
          %v877 = vpop.trf.xlu0
          %v878 = vpop.trf.xlu0
          %v879 = vpop.trf.xlu0
          %v880 = vpop.trf.xlu0
          %v881 = vpop.trf.xlu0
          %v882 = vpop.trf.xlu0
          %v883 = vpop.trf.xlu0
          %v884 = vpop.trf.xlu0
          %v885 = vpop.trf.xlu0
          %s886 = scalar_lea.vmem [#allocation2], %s850
          %v887 = vld [vmem:[%s886] sm:$0xff]
          %v888 = vld [vmem:[%s886 + $0x8] sm:$0xff]
          %890 = vset.pattern.permute.xlu0 0
          %891 = vperm.xlu0 %890, %v852
          %v892 = vpop.permute.xlu0 %891
          %895 = vset.pattern.permute.xlu0 0
          %896 = vperm.xlu0 %895, %v853
          %v897 = vpop.permute.xlu0 %896
          %v899 = vperm.slane %v870, 0
          %v900 = vsub.f32 %v892, %v899
          %v901 = vsub.f32 %v897, %v899
          %v902 = vsel %vm842, %v900, -1e+30
          %v903 = vsel %vm843, %v901, -1e+30
          %v904 = vmul.f32 %v902, 1.442695
          %v905 = vpow.pop %v904
          %v906 = vmul.f32 %v903, 1.442695
          %v907 = vpow.pop %v906
          %v908 = vpack.c.bf16 %v888, %v887
          %910 = vrot.lane.b32.xlu0 %v908, 96
          %v911 = vpop.permute.xlu0 %910
          %vm912 = vcmask 64512
          %v914 = vsel %vm912, %v908, 0
          %v917 = vsel %vm912, %v911, 0
          %919 = vmatpush.bf16.xpose.msra.mxu0 0
          %920 = vmatpush.bf16.xpose.msra.mxu0 0
          %921 = vmatpush.bf16.xpose.msra.mxu0 0
          %922 = vmatpush.bf16.xpose.msra.mxu0 0
          %923 = vmatpush.bf16.xpose.msra.mxu0 0
          %924 = vmatpush.bf16.xpose.msra.mxu0 0
          %925 = vmatpush.bf16.xpose.msra.mxu0 0
          %926 = vmatpush.bf16.xpose.msra.mxu0 %v917
          %927 = vmatmul.bf16.gmra.mxu0 %v914
          %v928 = vpop.f32.mrf.mxu0
          %v929 = vadd.f32 0.0, %v928
          %v930 = vpop.f32.mrf.mxu0
          %v931 = vadd.f32 0.0, %v930
          %932 = vdwg.mxu0
          %v933 = vmul.f32 %v929, %v905
          %v934 = vmul.f32 %v931, %v907
          %v935 = vpack.c.bf16 %v934, %v933
          %936 = vrot.lane.b32.xlu0 %v908, 64
          %v937 = vpop.permute.xlu0 %936
          %vm939 = vcmask 130048
          %v941 = vsel %vm939, %v935, 0
          %943 = vmatpush.bf16.msra.mxu0 0
          %944 = vmatpush.bf16.msra.mxu0 0
          %945 = vmatpush.bf16.msra.mxu0 0
          %946 = vmatpush.bf16.msra.mxu0 0
          %947 = vmatpush.bf16.msra.mxu0 0
          %948 = vmatpush.bf16.msra.mxu0 0
          %949 = vmatpush.bf16.msra.mxu0 0
          %950 = vmatpush.bf16.msra.mxu0 %v937
          %951 = vmatmul.bf16.gmra.mxu0 %v941
          %v952 = vpop.f32.mrf.mxu0
          %v953 = vadd.f32 0.0, %v952
          %v954 = vpop.f32.mrf.mxu0
          %v955 = vadd.f32 0.0, %v954
          %956 = vdwg.mxu0
          %v957 = vmul.f32 %v953, %v953
          %v958 = vmul.f32 %v955, %v955
          %v959 = vsel %vm912, %v957, 0.0
          %960 = vadd.xlane.f32.xlu0 %v959
          %v961 = vpop.xlane.xlu0 %960
          %v962 = vsel %vm912, %v958, 0.0
          %963 = vadd.xlane.f32.xlu0 %v962
          %v964 = vpop.xlane.xlu0 %963
          %v965 = vrcp.pop 8.0
          %v966 = vmul.f32 8.0, %v965
          %v967 = vsub.f32 1.0, %v966
          %v968 = vmul.f32 %v965, %v967
          %v969 = vadd.f32 %v965, %v968
          %vm970 = vweird.f32 %v965
          %v971 = vsel %vm970, %v965, %v969
          %v972 = vmul.f32 %v961, %v971
          %v973 = vmul.f32 %v964, %v971
          %v974 = vadd.f32 %v972, 1e-06
          %v975 = vadd.f32 %v973, 1e-06
          %v976 = vrsqrt.pop %v974
          %v977 = vmul.f32 %v976, %v974
          %v978 = vmul.f32 %v977, %v976
          %v979 = vmul.f32 0.5, %v978
          %v980 = vsub.f32 1.5, %v979
          %v981 = vmul.f32 %v976, %v980
          %vm982 = vweird.f32 %v974
          %vm983 = vweird.f32 %v976
          %vm984 = vmor %vm982, %vm983
          %v985 = vsel %vm984, %v976, %v981
          %v986 = vrsqrt.pop %v975
          %v987 = vmul.f32 %v986, %v975
          %v988 = vmul.f32 %v987, %v986
          %v989 = vmul.f32 0.5, %v988
          %v990 = vsub.f32 1.5, %v989
          %v991 = vmul.f32 %v986, %v990
          %vm992 = vweird.f32 %v975
          %vm993 = vweird.f32 %v986
          %vm994 = vmor %vm992, %vm993
          %v995 = vsel %vm994, %v986, %v991
          %v996 = vmul.f32 %v953, %v985
          %v997 = vmul.f32 %v955, %v995
          %s998 = scalar_lea.vmem [#allocation4], %s850
          %999 = vst.msk [vmem:[%s998] sm:$0xff] %vm912, %v996
          %1000 = vst.msk [vmem:[%s998 + $0x8] sm:$0xff] %vm912, %v997
          %v1001 = vld [vmem:[%s886] sm:$0xff]
          %v1002 = vld [vmem:[%s886 + $0x8] sm:$0xff]
          %1003 = vset.pattern.permute.xlu0 1
          %1004 = vperm.xlu0 %1003, %v852
          %v1005 = vpop.permute.xlu0 %1004
          %1007 = vset.pattern.permute.xlu0 1
          %1008 = vperm.xlu0 %1007, %v853
          %v1009 = vpop.permute.xlu0 %1008
          %v1011 = vperm.slane %v870, 1
          %v1012 = vsub.f32 %v1005, %v1011
          %v1013 = vsub.f32 %v1009, %v1011
          %v1014 = vsel %vm842, %v1012, -1e+30
          %v1015 = vsel %vm843, %v1013, -1e+30
          %v1016 = vmul.f32 %v1014, 1.442695
          %v1017 = vpow.pop %v1016
          %v1018 = vmul.f32 %v1015, 1.442695
          %v1019 = vpow.pop %v1018
          %v1020 = vpack.c.bf16 %v1002, %v1001
          %1022 = vrot.lane.b32.xlu0 %v1020, 120
          %v1023 = vpop.permute.xlu0 %1022
          %1024 = vrot.lane.b32.xlu0 %v1020, 88
          %v1025 = vpop.permute.xlu0 %1024
          %v1027 = vsel %vm912, %v1023, 0
          %v1030 = vsel %vm912, %v1025, 0
          %1032 = vmatpush.bf16.xpose.msra.mxu0 0
          %1033 = vmatpush.bf16.xpose.msra.mxu0 0
          %1034 = vmatpush.bf16.xpose.msra.mxu0 0
          %1035 = vmatpush.bf16.xpose.msra.mxu0 0
          %1036 = vmatpush.bf16.xpose.msra.mxu0 0
          %1037 = vmatpush.bf16.xpose.msra.mxu0 0
          %1038 = vmatpush.bf16.xpose.msra.mxu0 0
          %1039 = vmatpush.bf16.xpose.msra.mxu0 %v1030
          %1040 = vmatmul.bf16.gmra.mxu0 %v1027
          %v1041 = vpop.f32.mrf.mxu0
          %v1042 = vadd.f32 0.0, %v1041
          %v1043 = vpop.f32.mrf.mxu0
          %v1044 = vadd.f32 0.0, %v1043
          %1045 = vdwg.mxu0
          %v1046 = vmul.f32 %v1042, %v1017
          %v1047 = vmul.f32 %v1044, %v1019
          %v1048 = vpack.c.bf16 %v1047, %v1046
          %1049 = vrot.lane.b32.xlu0 %v1020, 56
          %v1050 = vpop.permute.xlu0 %1049
          %v1053 = vsel %vm939, %v1048, 0
          %1055 = vmatpush.bf16.msra.mxu0 0
          %1056 = vmatpush.bf16.msra.mxu0 0
          %1057 = vmatpush.bf16.msra.mxu0 0
          %1058 = vmatpush.bf16.msra.mxu0 0
          %1059 = vmatpush.bf16.msra.mxu0 0
          %1060 = vmatpush.bf16.msra.mxu0 0
          %1061 = vmatpush.bf16.msra.mxu0 0
          %1062 = vmatpush.bf16.msra.mxu0 %v1050
          %1063 = vmatmul.bf16.gmra.mxu0 %v1053
          %v1064 = vpop.f32.mrf.mxu0
          %v1065 = vadd.f32 0.0, %v1064
          %v1066 = vpop.f32.mrf.mxu0
          %v1067 = vadd.f32 0.0, %v1066
          %1068 = vdwg.mxu0
          %v1069 = vmul.f32 %v1065, %v1065
          %v1070 = vmul.f32 %v1067, %v1067
          %v1071 = vsel %vm912, %v1069, 0.0
          %1072 = vadd.xlane.f32.xlu0 %v1071
          %v1073 = vpop.xlane.xlu0 %1072
          %v1074 = vsel %vm912, %v1070, 0.0
          %1075 = vadd.xlane.f32.xlu0 %v1074
          %v1076 = vpop.xlane.xlu0 %1075
          %v1077 = vmul.f32 %v1073, %v971
          %v1078 = vmul.f32 %v1076, %v971
          %v1079 = vadd.f32 %v1077, 1e-06
          %v1080 = vadd.f32 %v1078, 1e-06
          %v1081 = vrsqrt.pop %v1079
          %v1082 = vmul.f32 %v1081, %v1079
          %v1083 = vmul.f32 %v1082, %v1081
          %v1084 = vmul.f32 0.5, %v1083
          %v1085 = vsub.f32 1.5, %v1084
          %v1086 = vmul.f32 %v1081, %v1085
          %vm1087 = vweird.f32 %v1079
          %vm1088 = vweird.f32 %v1081
          %vm1089 = vmor %vm1087, %vm1088
          %v1090 = vsel %vm1089, %v1081, %v1086
          %v1091 = vrsqrt.pop %v1080
          %v1092 = vmul.f32 %v1091, %v1080
          %v1093 = vmul.f32 %v1092, %v1091
          %v1094 = vmul.f32 0.5, %v1093
          %v1095 = vsub.f32 1.5, %v1094
          %v1096 = vmul.f32 %v1091, %v1095
          %vm1097 = vweird.f32 %v1080
          %vm1098 = vweird.f32 %v1091
          %vm1099 = vmor %vm1097, %vm1098
          %v1100 = vsel %vm1099, %v1091, %v1096
          %v1101 = vmul.f32 %v1065, %v1090
          %v1102 = vmul.f32 %v1067, %v1100
          %1105 = vrot.lane.b32.xlu0 %v1101, 8
          %v1106 = vpop.permute.xlu0 %1105
          %1107 = vrot.lane.b32.xlu0 %v1102, 8
          %v1108 = vpop.permute.xlu0 %1107
          %vm1111 = vcmask 130112
          %1112 = vst.msk [vmem:[%s998] sm:$0xff] %vm1111, %v1106
          %1113 = vst.msk [vmem:[%s998 + $0x8] sm:$0xff] %vm1111, %v1108
          %v1114 = vld [vmem:[%s886] sm:$0xff]
          %v1115 = vld [vmem:[%s886 + $0x8] sm:$0xff]
          %1116 = vset.pattern.permute.xlu0 2
          %1117 = vperm.xlu0 %1116, %v852
          %v1118 = vpop.permute.xlu0 %1117
          %1120 = vset.pattern.permute.xlu0 2
          %1121 = vperm.xlu0 %1120, %v853
          %v1122 = vpop.permute.xlu0 %1121
          %v1124 = vperm.slane %v870, 2
          %v1125 = vsub.f32 %v1118, %v1124
          %v1126 = vsub.f32 %v1122, %v1124
          %v1127 = vsel %vm842, %v1125, -1e+30
          %v1128 = vsel %vm843, %v1126, -1e+30
          %v1129 = vmul.f32 %v1127, 1.442695
          %v1130 = vpow.pop %v1129
          %v1131 = vmul.f32 %v1128, 1.442695
          %v1132 = vpow.pop %v1131
          %v1133 = vpack.c.bf16 %v1115, %v1114
          %1135 = vrot.lane.b32.xlu0 %v1133, 112
          %v1136 = vpop.permute.xlu0 %1135
          %1137 = vrot.lane.b32.xlu0 %v1133, 80
          %v1138 = vpop.permute.xlu0 %1137
          %v1140 = vsel %vm912, %v1136, 0
          %v1143 = vsel %vm912, %v1138, 0
          %1145 = vmatpush.bf16.xpose.msra.mxu0 0
          %1146 = vmatpush.bf16.xpose.msra.mxu0 0
          %1147 = vmatpush.bf16.xpose.msra.mxu0 0
          %1148 = vmatpush.bf16.xpose.msra.mxu0 0
          %1149 = vmatpush.bf16.xpose.msra.mxu0 0
          %1150 = vmatpush.bf16.xpose.msra.mxu0 0
          %1151 = vmatpush.bf16.xpose.msra.mxu0 0
          %1152 = vmatpush.bf16.xpose.msra.mxu0 %v1143
          %1153 = vmatmul.bf16.gmra.mxu0 %v1140
          %v1154 = vpop.f32.mrf.mxu0
          %v1155 = vadd.f32 0.0, %v1154
          %v1156 = vpop.f32.mrf.mxu0
          %v1157 = vadd.f32 0.0, %v1156
          %1158 = vdwg.mxu0
          %v1159 = vmul.f32 %v1155, %v1130
          %v1160 = vmul.f32 %v1157, %v1132
          %v1161 = vpack.c.bf16 %v1160, %v1159
          %1162 = vrot.lane.b32.xlu0 %v1133, 48
          %v1163 = vpop.permute.xlu0 %1162
          %v1166 = vsel %vm939, %v1161, 0
          %1168 = vmatpush.bf16.msra.mxu0 0
          %1169 = vmatpush.bf16.msra.mxu0 0
          %1170 = vmatpush.bf16.msra.mxu0 0
          %1171 = vmatpush.bf16.msra.mxu0 0
          %1172 = vmatpush.bf16.msra.mxu0 0
          %1173 = vmatpush.bf16.msra.mxu0 0
          %1174 = vmatpush.bf16.msra.mxu0 0
          %1175 = vmatpush.bf16.msra.mxu0 %v1163
          %1176 = vmatmul.bf16.gmra.mxu0 %v1166
          %v1177 = vpop.f32.mrf.mxu0
          %v1178 = vadd.f32 0.0, %v1177
          %v1179 = vpop.f32.mrf.mxu0
          %v1180 = vadd.f32 0.0, %v1179
          %1181 = vdwg.mxu0
          %v1182 = vmul.f32 %v1178, %v1178
          %v1183 = vmul.f32 %v1180, %v1180
          %v1184 = vsel %vm912, %v1182, 0.0
          %1185 = vadd.xlane.f32.xlu0 %v1184
          %v1186 = vpop.xlane.xlu0 %1185
          %v1187 = vsel %vm912, %v1183, 0.0
          %1188 = vadd.xlane.f32.xlu0 %v1187
          %v1189 = vpop.xlane.xlu0 %1188
          %v1190 = vmul.f32 %v1186, %v971
          %v1191 = vmul.f32 %v1189, %v971
          %v1192 = vadd.f32 %v1190, 1e-06
          %v1193 = vadd.f32 %v1191, 1e-06
          %v1194 = vrsqrt.pop %v1192
          %v1195 = vmul.f32 %v1194, %v1192
          %v1196 = vmul.f32 %v1195, %v1194
          %v1197 = vmul.f32 0.5, %v1196
          %v1198 = vsub.f32 1.5, %v1197
          %v1199 = vmul.f32 %v1194, %v1198
          %vm1200 = vweird.f32 %v1192
          %vm1201 = vweird.f32 %v1194
          %vm1202 = vmor %vm1200, %vm1201
          %v1203 = vsel %vm1202, %v1194, %v1199
          %v1204 = vrsqrt.pop %v1193
          %v1205 = vmul.f32 %v1204, %v1193
          %v1206 = vmul.f32 %v1205, %v1204
          %v1207 = vmul.f32 0.5, %v1206
          %v1208 = vsub.f32 1.5, %v1207
          %v1209 = vmul.f32 %v1204, %v1208
          %vm1210 = vweird.f32 %v1193
          %vm1211 = vweird.f32 %v1204
          %vm1212 = vmor %vm1210, %vm1211
          %v1213 = vsel %vm1212, %v1204, %v1209
          %v1214 = vmul.f32 %v1178, %v1203
          %v1215 = vmul.f32 %v1180, %v1213
          %1218 = vrot.lane.b32.xlu0 %v1214, 16
          %v1219 = vpop.permute.xlu0 %1218
          %1220 = vrot.lane.b32.xlu0 %v1215, 16
          %v1221 = vpop.permute.xlu0 %1220
          %vm1224 = vcmask 195712
          %1225 = vst.msk [vmem:[%s998] sm:$0xff] %vm1224, %v1219
          %1226 = vst.msk [vmem:[%s998 + $0x8] sm:$0xff] %vm1224, %v1221
          %v1227 = vld [vmem:[%s886] sm:$0xff]
          %v1228 = vld [vmem:[%s886 + $0x8] sm:$0xff]
          %1229 = vset.pattern.permute.xlu0 3
          %1230 = vperm.xlu0 %1229, %v852
          %v1231 = vpop.permute.xlu0 %1230
          %1233 = vset.pattern.permute.xlu0 3
          %1234 = vperm.xlu0 %1233, %v853
          %v1235 = vpop.permute.xlu0 %1234
          %v1237 = vperm.slane %v870, 3
          %v1238 = vsub.f32 %v1231, %v1237
          %v1239 = vsub.f32 %v1235, %v1237
          %v1240 = vsel %vm842, %v1238, -1e+30
          %v1241 = vsel %vm843, %v1239, -1e+30
          %v1242 = vmul.f32 %v1240, 1.442695
          %v1243 = vpow.pop %v1242
          %v1244 = vmul.f32 %v1241, 1.442695
          %v1245 = vpow.pop %v1244
          %v1246 = vpack.c.bf16 %v1228, %v1227
          %1248 = vrot.lane.b32.xlu0 %v1246, 104
          %v1249 = vpop.permute.xlu0 %1248
          %1250 = vrot.lane.b32.xlu0 %v1246, 72
          %v1251 = vpop.permute.xlu0 %1250
          %v1253 = vsel %vm912, %v1249, 0
          %v1256 = vsel %vm912, %v1251, 0
          %1258 = vmatpush.bf16.xpose.msra.mxu0 0
          %1259 = vmatpush.bf16.xpose.msra.mxu0 0
          %1260 = vmatpush.bf16.xpose.msra.mxu0 0
          %1261 = vmatpush.bf16.xpose.msra.mxu0 0
          %1262 = vmatpush.bf16.xpose.msra.mxu0 0
          %1263 = vmatpush.bf16.xpose.msra.mxu0 0
          %1264 = vmatpush.bf16.xpose.msra.mxu0 0
          %1265 = vmatpush.bf16.xpose.msra.mxu0 %v1256
          %1266 = vmatmul.bf16.gmra.mxu0 %v1253
          %v1267 = vpop.f32.mrf.mxu0
          %v1268 = vadd.f32 0.0, %v1267
          %v1269 = vpop.f32.mrf.mxu0
          %v1270 = vadd.f32 0.0, %v1269
          %1271 = vdwg.mxu0
          %v1272 = vmul.f32 %v1268, %v1243
          %v1273 = vmul.f32 %v1270, %v1245
          %v1274 = vpack.c.bf16 %v1273, %v1272
          %1275 = vrot.lane.b32.xlu0 %v1246, 40
          %v1276 = vpop.permute.xlu0 %1275
          %v1279 = vsel %vm939, %v1274, 0
          %1281 = vmatpush.bf16.msra.mxu0 0
          %1282 = vmatpush.bf16.msra.mxu0 0
          %1283 = vmatpush.bf16.msra.mxu0 0
          %1284 = vmatpush.bf16.msra.mxu0 0
          %1285 = vmatpush.bf16.msra.mxu0 0
          %1286 = vmatpush.bf16.msra.mxu0 0
          %1287 = vmatpush.bf16.msra.mxu0 0
          %1288 = vmatpush.bf16.msra.mxu0 %v1276
          %1289 = vmatmul.bf16.gmra.mxu0 %v1279
          %v1290 = vpop.f32.mrf.mxu0
          %v1291 = vadd.f32 0.0, %v1290
          %v1292 = vpop.f32.mrf.mxu0
          %v1293 = vadd.f32 0.0, %v1292
          %1294 = vdwg.mxu0
          %v1295 = vmul.f32 %v1291, %v1291
          %v1296 = vmul.f32 %v1293, %v1293
          %v1297 = vsel %vm912, %v1295, 0.0
          %1298 = vadd.xlane.f32.xlu0 %v1297
          %v1299 = vpop.xlane.xlu0 %1298
          %v1300 = vsel %vm912, %v1296, 0.0
          %1301 = vadd.xlane.f32.xlu0 %v1300
          %v1302 = vpop.xlane.xlu0 %1301
          %v1303 = vmul.f32 %v1299, %v971
          %v1304 = vmul.f32 %v1302, %v971
          %v1305 = vadd.f32 %v1303, 1e-06
          %v1306 = vadd.f32 %v1304, 1e-06
          %v1307 = vrsqrt.pop %v1305
          %v1308 = vmul.f32 %v1307, %v1305
          %v1309 = vmul.f32 %v1308, %v1307
          %v1310 = vmul.f32 0.5, %v1309
          %v1311 = vsub.f32 1.5, %v1310
          %v1312 = vmul.f32 %v1307, %v1311
          %vm1313 = vweird.f32 %v1305
          %vm1314 = vweird.f32 %v1307
          %vm1315 = vmor %vm1313, %vm1314
          %v1316 = vsel %vm1315, %v1307, %v1312
          %v1317 = vrsqrt.pop %v1306
          %v1318 = vmul.f32 %v1317, %v1306
          %v1319 = vmul.f32 %v1318, %v1317
          %v1320 = vmul.f32 0.5, %v1319
          %v1321 = vsub.f32 1.5, %v1320
          %v1322 = vmul.f32 %v1317, %v1321
          %vm1323 = vweird.f32 %v1306
          %vm1324 = vweird.f32 %v1317
          %vm1325 = vmor %vm1323, %vm1324
          %v1326 = vsel %vm1325, %v1317, %v1322
          %v1327 = vmul.f32 %v1291, %v1316
          %v1328 = vmul.f32 %v1293, %v1326
          %1331 = vrot.lane.b32.xlu0 %v1327, 24
          %v1332 = vpop.permute.xlu0 %1331
          %1333 = vrot.lane.b32.xlu0 %v1328, 24
          %v1334 = vpop.permute.xlu0 %1333
          %vm1337 = vcmask 261312
          %1338 = vst.msk [vmem:[%s998] sm:$0xff] %vm1337, %v1332
          %1339 = vst.msk [vmem:[%s998 + $0x8] sm:$0xff] %vm1337, %v1334
        $region57: #{gate_retention_forward.1} parent=39 // loop_footer
          %s849 = sadd.s32 1, %s845
        $region58: #{gate_retention_forward.1} parent=39 // loop_footer_branch
          %844 = sbr.rel target = $region54
        $region59: #{gate_retention_forward.1} parent=39 // loop_exit
          _
        %v1340 = vld [vmem:[#allocation2] sm:$0xff]
        %v1341 = vld [vmem:[#allocation2 + $0x8] sm:$0xff]
        %v1342 = vld [vmem:[#allocation2 + $0x10] sm:$0xff]
        %v1343 = vld [vmem:[#allocation2 + $0x18] sm:$0xff]
        %v1344 = vld [vmem:[#allocation4] sm:$0xff]
        %v1345 = vld [vmem:[#allocation4 + $0x8] sm:$0xff]
        %v1346 = vld [vmem:[#allocation4 + $0x10] sm:$0xff]
        %v1347 = vld [vmem:[#allocation4 + $0x18] sm:$0xff]
        %v1348 = vsub.f32 0.0, %v1340
        %v1349 = vsub.f32 0.0, %v1341
        %v1350 = vsub.f32 0.0, %v1342
        %v1351 = vsub.f32 0.0, %v1343
        %v1352 = vmul.f32 %v1348, 1.442695
        %v1353 = vpow.pop %v1352
        %v1354 = vmul.f32 %v1349, 1.442695
        %v1355 = vpow.pop %v1354
        %v1356 = vmul.f32 %v1350, 1.442695
        %v1357 = vpow.pop %v1356
        %v1358 = vmul.f32 %v1351, 1.442695
        %v1359 = vpow.pop %v1358
        %v1360 = vadd.f32 %v1353, 1.0
        %v1361 = vadd.f32 %v1355, 1.0
        %v1362 = vadd.f32 %v1357, 1.0
        %v1363 = vadd.f32 %v1359, 1.0
        %v1364 = vrcp.pop %v1360
        %v1365 = vrcp.pop %v1361
        %v1366 = vrcp.pop %v1362
        %v1367 = vrcp.pop %v1363
        %v1368 = vmul.f32 %v1340, %v1364
        %v1369 = vmul.f32 %v1341, %v1365
        %v1370 = vmul.f32 %v1342, %v1366
        %v1371 = vmul.f32 %v1343, %v1367
        %1376 = vrot.lane.b32.xlu0 %v1344, 96
        %v1377 = vpop.permute.xlu0 %1376
        %1378 = vrot.lane.b32.xlu0 %v1345, 96
        %v1379 = vpop.permute.xlu0 %1378
        %1380 = vrot.lane.b32.xlu0 %v1346, 96
        %v1381 = vpop.permute.xlu0 %1380
        %1382 = vrot.lane.b32.xlu0 %v1347, 96
        %v1383 = vpop.permute.xlu0 %1382
        %v1388 = vmul.f32 %v1368, %v1377
        %v1389 = vmul.f32 %v1369, %v1379
        %v1390 = vmul.f32 %v1370, %v1381
        %v1391 = vmul.f32 %v1371, %v1383
        %v1392 = vpack.c.bf16 %v1389, %v1388
        %v1393 = vpack.c.bf16 %v1391, %v1390
        %v1394 = vld [vmem:[#allocation10] sm:$0xf]
        %v1395 = vld [vmem:[#allocation10 + $0x4] sm:$0xf]
        %v1396 = vld [vmem:[#allocation10 + $0x8] sm:$0xf]
        %v1397 = vld [vmem:[#allocation10 + $0xc] sm:$0xf]
        %1400 = vrot.lane.b32.xlu0 %v1392, 32
        %v1401 = vpop.permute.xlu0 %1400
        %1402 = vrot.lane.b32.xlu0 %v1393, 32
        %v1403 = vpop.permute.xlu0 %1402
        %v1408 = vunpack.c.l.b16 %v1394
        %v1409 = vunpack.c.l.b16 %v1395
        %v1410 = vunpack.c.l.b16 %v1396
        %v1411 = vunpack.c.l.b16 %v1397
        %v1412 = vpack.c.b16 %v1409, %v1408
        %v1413 = vpack.c.b16 %v1411, %v1410
        %v1417 = vsel %vm337, %v1401, 0
        %v1420 = vsel %vm337, %v1403, 0
        %1422 = vmatpush.bf16.msra.mxu0 0
        %1423 = vmatpush.bf16.msra.mxu0 0
        %1424 = vmatpush.bf16.msra.mxu0 0
        %1425 = vmatpush.bf16.msra.mxu0 0
        %1426 = vmatpush.bf16.msra.mxu0 0
        %1427 = vmatpush.bf16.msra.mxu0 0
        %1428 = vmatpush.bf16.msra.mxu0 %v1413
        %1429 = vmatpush.bf16.msra.mxu0 %v1412
        %1430 = vmatmul.bf16.gmra.mxu0 %v1417
        %v1431 = vpop.f32.mrf.mxu0
        %v1432 = vadd.f32 0.0, %v1431
        %v1433 = vpop.f32.mrf.mxu0
        %v1434 = vadd.f32 0.0, %v1433
        %1435 = vmatmul.bf16.gmra.mxu0 %v1420
        %v1436 = vpop.f32.mrf.mxu0
        %v1437 = vadd.f32 0.0, %v1436
        %v1438 = vpop.f32.mrf.mxu0
        %v1439 = vadd.f32 0.0, %v1438
        %1440 = vdwg.mxu0
        %1441 = vst.msk [vmem:[%s302] sm:$0xff] %vm337, %v1432
        %1442 = vst.msk [vmem:[%s302 + $0x8] sm:$0xff] %vm337, %v1434
        %1443 = vst.msk [vmem:[%s302 + $0x10] sm:$0xff] %vm337, %v1437
        %1444 = vst.msk [vmem:[%s302 + $0x18] sm:$0xff] %vm337, %v1439
        %s1445 = sand.u32 %s148, 1
        %s1446 = scalar_lea.sflag [#allocation7], %s1445
        %s1447 = sand.u32 %s148, 1
        %s1448 = smul.addr %s1447, 32
        %s1449 = scalar_lea.vmem [#allocation11], %s1448
        // Predicated region
        $region60: #{gate_retention_forward.1} parent=39 // pred_check
          %p1450 = pneg %p158
        $region61: #{gate_retention_forward.1} parent=39 // pred_check_branch
          %1452 = sbr.rel (%p1450) target = $region63
        $region62: #{gate_retention_forward.1} parent=39 // pred_region
          %s1453 = smul.u32 4, %s25
          %1455 = vsyncadd %s1446, 0
          %s1456 = smul.addr %s1453, 8
          %s1457 = scalar_lea.hbm %s5, %s1456
          %s1458 = sshll.u32 %s1449, 4
          %s1459 = int_to_ptr.vmem [resolvable:$true] %s1458
          %s1460 = sshll.u32 %s1457, 4
          %s1461 = int_to_ptr.hbm [resolvable:$true] %s1460
          %1466 = dma.vmem_to_hbm [thread:$0]  %s1459, 512, %s1461, %s1446, 128, 128, 8
        $region63: #{gate_retention_forward.1} parent=39 // pred_fallthru
          _
      $region40: #{gate_retention_forward.1} parent=5 // pred_fallthru
        _
      %p1467 = scmp.le.s32.totalorder 2, %s20
      // Predicated region
      $region64: #{gate_retention_forward.1} parent=5 // pred_check
        %p1468 = pneg %p1467
      $region65: #{gate_retention_forward.1} parent=5 // pred_check_branch
        %1470 = sbr.rel (%p1468) target = $region67
      $region66: #{gate_retention_forward.1} parent=5 // pred_region
        %s1471 = ssub.s32 %s20, 2
        // Predicated region
        $region68: #{gate_retention_forward.1} parent=66 // pred_check
          %p1472 = pneg %p164
        $region69: #{gate_retention_forward.1} parent=66 // pred_check_branch
          %1474 = sbr.rel (%p1472) target = $region71
        $region70: #{gate_retention_forward.1} parent=66 // pred_region
          %s1475 = sand.u32 %s149, 1
          %s1476 = scalar_lea.sflag [#allocation7], %s1475
          %s1477 = sand.u32 %s149, 1
          %s1478 = smul.addr %s1477, 32
          %s1479 = scalar_lea.vmem [#allocation11], %s1478
          %1481 = dma.done %s1476, 512
        $region71: #{gate_retention_forward.1} parent=66 // pred_fallthru
          _
      $region67: #{gate_retention_forward.1} parent=5 // pred_fallthru
        _
    $region6: #{gate_retention_forward.1} parent=1 // loop_footer
      %s24 = sadd.s32 1, %s20
    $region7: #{gate_retention_forward.1} parent=1 // loop_footer_branch
      %19 = sbr.rel target = $region3
    $region8: #{gate_retention_forward.1} parent=1 // loop_exit
      _
    %1482 = vsyncpa [#allocation6], 1
    %s1483 = scalar_lea.sflag [#allocation6], 1
    %1484 = vsyncpa %s1483, 1
    %1485 = vsyncpa [#allocation9], 1
    %s1486 = scalar_lea.sflag [#allocation9], 1
    %1487 = vsyncpa %s1486, 1
    %1488 = vsyncpa [#allocation7], 1
    %s1489 = scalar_lea.sflag [#allocation7], 1
    %1490 = vsyncpa %s1489, 1

</llo_original>
